<compile_context>
chip_gen: v5e
topology: v5e:2x2
jax: 0.10.0
libtpu: 0.0.40
codegen_flags: <defaults>
</compile_context>

<pallas_src>
import functools

import numpy as np
import jax
import jax.numpy as jnp
from jax.experimental import pallas as pl
from jax.experimental.pallas import tpu as pltpu

_BN_EPS = 1e-5


def _round_up(x, m):
    return (x + m - 1) // m * m


# -----------------------------------------------------------------------------
# Fused kernel: fusion gates -> 3x (Linear + ReLU + full-batch BN) -> head
# All tensors are transposed: (feature, batch) so the batch sits on lanes.
# -----------------------------------------------------------------------------
def cdr_sb_fused_kernel(uz_ref, uc_ref, vz_ref, vc_ref, gates_ref,
                        w1u_ref, w1v_ref, b1_ref, g1_ref, be1_ref,
                        w2_ref, b2_ref, g2_ref, be2_ref,
                        w3_ref, b3_ref, g3_ref, be3_ref,
                        wf_ref, bf_ref,
                        out_ref, *, n_valid):
    bp = out_ref.shape[1]

    # In-kernel validity mask (static n_valid): 1 for real columns, 0 for pad.
    mask = (jax.lax.broadcasted_iota(jnp.int32, (1, bp), 1)
            < n_valid).astype(jnp.float32)
    inv_n = 1.0 / n_valid

    def batchnorm(h, g, be):
        # Training-mode BN, biased variance, exact full-batch stats (two-pass).
        hm = h * mask
        mean = jnp.sum(hm, axis=1, keepdims=True) * inv_n          # lane reduce
        cen = (h - mean) * mask
        var = jnp.sum(cen * cen, axis=1, keepdims=True) * inv_n     # lane reduce
        return (h - mean) * jax.lax.rsqrt(var + _BN_EPS) * g + be

    gates = gates_ref[...]
    a_u = gates[0:1, :]     # add c_u to u_feat
    b_vc = gates[1:2, :]    # add c_v to v_feat
    b_uc = gates[2:3, :]    # add c_u to v_feat (original empty-history branch)

    uc = uc_ref[...]
    u_feat = uz_ref[...] + a_u * uc
    v_feat = vz_ref[...] + b_vc * vc_ref[...] + b_uc * uc

    # Layer 1: concat-free ([u, v] @ W1)^T as two transposed matmuls.
    h = (jnp.dot(w1u_ref[...], u_feat, preferred_element_type=jnp.float32)
         + jnp.dot(w1v_ref[...], v_feat, preferred_element_type=jnp.float32)
         + b1_ref[...])
    h = batchnorm(jnp.maximum(h, 0.0), g1_ref[...], be1_ref[...])

    # Layer 2.
    h = jnp.dot(w2_ref[...], h, preferred_element_type=jnp.float32) + b2_ref[...]
    h = batchnorm(jnp.maximum(h, 0.0), g2_ref[...], be2_ref[...])

    # Layer 3.
    h = jnp.dot(w3_ref[...], h, preferred_element_type=jnp.float32) + b3_ref[...]
    h = batchnorm(jnp.maximum(h, 0.0), g3_ref[...], be3_ref[...])

    # Head: Linear(D/4 -> 1) as a sublane multiply-reduce, then sigmoid (EUP).
    score = jnp.sum(h * wf_ref[...], axis=0, keepdims=True) + bf_ref[...]
    out_ref[...] = jax.nn.sigmoid(score)


# -----------------------------------------------------------------------------
# Wrapper
# -----------------------------------------------------------------------------
def _full_spec(shape):
    nd = len(shape)
    return pl.BlockSpec(shape, lambda i, _nd=nd: (0,) * _nd)


@jax.jit
def cdr_sb_forward(u_z, u_c, v_z, v_c, gates, params):
    """Gated fusion -> 3x (Linear+ReLU+BN-train) -> Linear(.,1) -> sigmoid."""
    (w1, b1, g1, be1, w2, b2, g2, be2, w3, b3, g3, be3, wf, bf) = params
    b_valid, d = u_z.shape

    # Pad batch (lane axis after transpose) to a multiple of 128 for dense
    # stores; padded columns are excluded from BN stats via the in-kernel mask.
    bp = _round_up(max(b_valid, 1), 128)
    pad = bp - b_valid

    def tpad(x):  # (B, D) -> (D, BP): batch on lanes.
        xt = x.T
        return jnp.pad(xt, ((0, 0), (0, pad))) if pad else xt

    uzT, ucT, vzT, vcT = (tpad(x) for x in (u_z, u_c, v_z, v_c))
    gatesT = jnp.pad(gates.T.astype(jnp.float32),
                     ((0, 8 - gates.shape[1]), (0, pad)))            # (8, BP)

    col = lambda v: v.reshape(-1, 1).astype(jnp.float32)
    w1uT = w1[:d].T.astype(jnp.float32)      # (D, D)
    w1vT = w1[d:].T.astype(jnp.float32)      # (D, D)
    w2T = w2.T.astype(jnp.float32)           # (D/2, D)
    w3T = w3.T.astype(jnp.float32)           # (D/4, D/2)

    inputs = (uzT, ucT, vzT, vcT, gatesT,
              w1uT, w1vT, col(b1), col(g1), col(be1),
              w2T, col(b2), col(g2), col(be2),
              w3T, col(b3), col(g3), col(be3),
              col(wf), col(bf))

    out = pl.pallas_call(
        functools.partial(cdr_sb_fused_kernel, n_valid=b_valid),
        grid=(1,),
        in_specs=tuple(_full_spec(x.shape) for x in inputs),
        out_specs=_full_spec((1, bp)),
        out_shape=jax.ShapeDtypeStruct((1, bp), jnp.float32),
        compiler_params=pltpu.CompilerParams(
            dimension_semantics=("arbitrary",)),
    )(*inputs)

    return out[0, :b_valid]   # matches .squeeze() in the PyTorch module


# -----------------------------------------------------------------------------
# Pure-JAX reference (f32, mirrors the PyTorch math) for a correctness check
# -----------------------------------------------------------------------------
def reference_forward(u_z, u_c, v_z, v_c, gates, params, eps=_BN_EPS):
    (w1, b1, g1, be1, w2, b2, g2, be2, w3, b3, g3, be3, wf, bf) = params
    a_u, b_vc, b_uc = gates[:, 0:1], gates[:, 1:2], gates[:, 2:3]
    u_feat = u_z + a_u * u_c
    v_feat = v_z + b_vc * v_c + b_uc * u_c
    x = jnp.concatenate([u_feat, v_feat], axis=1)

    def bn(x, g, b):
        m = jnp.mean(x, axis=0, keepdims=True)
        v = jnp.mean((x - m) ** 2, axis=0, keepdims=True)
        return (x - m) * jax.lax.rsqrt(v + eps) * g + b

    x = bn(jnp.maximum(x @ w1 + b1, 0.0), g1, be1)
    x = bn(jnp.maximum(x @ w2 + b2, 0.0), g2, be2)
    x = bn(jnp.maximum(x @ w3 + b3, 0.0), g3, be3)
    return jnp.squeeze(jax.nn.sigmoid(x @ wf + bf))


# -----------------------------------------------------------------------------
# Host-side glue: gate computation (ragged history + cosine similarity)
# -----------------------------------------------------------------------------
def compute_gates(nodes_u, nodes_v, red_by_friends, history_uv, item_table_np,
                  sim_threshold=0.5):
    B = len(nodes_u)
    gates = np.zeros((B, 3), dtype=np.float32)   # [add c_u->u, add c_v->v, add c_u->v]
    for i in range(B):
        user_id = int(nodes_u[i])
        item_id = int(nodes_v[i])
        rbf = int(red_by_friends[i])
        purd_items = [it for it in history_uv[user_id] if it != item_id]
        if len(purd_items) > 0:
            if rbf:
                anchor = item_table_np[item_id]
                com = item_table_np[purd_items]
                an = np.maximum(np.linalg.norm(anchor), 1e-8)
                cn = np.maximum(np.linalg.norm(com, axis=1), 1e-8)
                sims = com @ anchor / (an * cn)
                if float(sims.max()) > sim_threshold:
                    gates[i] = [1.0, 1.0, 0.0]
                else:
                    gates[i] = [0.0, 0.0, 0.0]
            else:
                gates[i] = [0.0, 0.0, 0.0]
        else:
            # original code: u_feat = z_u + c_u ; v_feat = z_v + c_u (uses u's c)
            gates[i] = [1.0, 0.0, 1.0]
    return gates


# -----------------------------------------------------------------------------
# Main
# -----------------------------------------------------------------------------
if __name__ == "__main__":
    key = jax.random.PRNGKey(0)

    B = 300               # batch (len(nodes_u)) -> padded to 384 lanes
    D = 32                # embed_dim = rep_u.dec_embed_dim
    NUM_USERS = 64
    NUM_ITEMS = 64

    keys = jax.random.split(key, 16)

    # rep_u / rep_v style embedding tables (z and c components), and v2e item table.
    u_z_tab = jax.random.normal(keys[0], (NUM_USERS, D), jnp.float32)
    u_c_tab = jax.random.normal(keys[1], (NUM_USERS, D), jnp.float32)
    v_z_tab = jax.random.normal(keys[2], (NUM_ITEMS, D), jnp.float32)
    v_c_tab = jax.random.normal(keys[3], (NUM_ITEMS, D), jnp.float32)
    item_emb = jax.random.normal(keys[4], (NUM_ITEMS, D), jnp.float32)   # v2e.weight

    # MLP parameters (Linear stored as (in, out); BN affine at PyTorch init).
    scale = 0.1
    w1 = scale * jax.random.normal(keys[5], (2 * D, D), jnp.float32)
    b1 = scale * jax.random.normal(keys[6], (1, D), jnp.float32)
    w2 = scale * jax.random.normal(keys[7], (D, D // 2), jnp.float32)
    b2 = scale * jax.random.normal(keys[8], (1, D // 2), jnp.float32)
    w3 = scale * jax.random.normal(keys[9], (D // 2, D // 4), jnp.float32)
    b3 = scale * jax.random.normal(keys[10], (1, D // 4), jnp.float32)
    wf = scale * jax.random.normal(keys[11], (D // 4, 1), jnp.float32)
    bf = scale * jax.random.normal(keys[12], (1, 1), jnp.float32)
    g1, be1 = jnp.ones((1, D), jnp.float32), jnp.zeros((1, D), jnp.float32)
    g2, be2 = jnp.ones((1, D // 2), jnp.float32), jnp.zeros((1, D // 2), jnp.float32)
    g3, be3 = jnp.ones((1, D // 4), jnp.float32), jnp.zeros((1, D // 4), jnp.float32)
    params = (w1, b1, g1, be1, w2, b2, g2, be2, w3, b3, g3, be3, wf, bf)

    # Deterministic batch indices and interaction metadata.
    nodes_u = np.arange(B, dtype=np.int64) % NUM_USERS
    nodes_v = (np.arange(B, dtype=np.int64) * 7 + 3) % NUM_ITEMS
    red_by_friends = (np.arange(B) % 2).astype(np.int32)

    # Deterministic purchase history (u % 5 == 0 -> empty history, exercises bug branch).
    history_uv = {u: [(u * 3 + j) % NUM_ITEMS for j in range(u % 5)]
                  for u in range(NUM_USERS)}

    # rep_u / rep_v lookups (glue).
    embed_u_z = u_z_tab[nodes_u]
    embed_u_c = u_c_tab[nodes_u]
    embed_v_z = v_z_tab[nodes_v]
    embed_v_c = v_c_tab[nodes_v]

    # Host-side gate precomputation (ragged / data-dependent control flow).
    gates = jnp.asarray(
        compute_gates(nodes_u, nodes_v, red_by_friends, history_uv,
                      np.asarray(item_emb)))

    scores = cdr_sb_forward(embed_u_z, embed_u_c, embed_v_z, embed_v_c, gates,
                            params)
    scores = jax.block_until_ready(scores)

    ref = jax.block_until_ready(
        reference_forward(embed_u_z, embed_u_c, embed_v_z, embed_v_c, gates, params))

    scores_np = np.asarray(scores)
    ref_np = np.asarray(ref)
    assert scores_np.shape == (B,)
    assert np.all(np.isfinite(scores_np))
    assert np.all((scores_np >= 0.0) & (scores_np <= 1.0))
    max_err = float(np.max(np.abs(scores_np - ref_np)))
    assert max_err < 1e-2, f"max |kernel - reference| = {max_err}"
    print("KERNEL_OK")
</pallas_src>

<mosaic_0001>
module attributes {stable_mosaic.version = 11 : i64} {
  func.func @cdr_sb_fused_kernel(%arg0: i32, %arg1: memref<32x384xf32, #tpu.memory_space<vmem>>, %arg2: memref<32x384xf32, #tpu.memory_space<vmem>>, %arg3: memref<32x384xf32, #tpu.memory_space<vmem>>, %arg4: memref<32x384xf32, #tpu.memory_space<vmem>>, %arg5: memref<8x384xf32, #tpu.memory_space<vmem>>, %arg6: memref<32x32xf32, #tpu.memory_space<vmem>>, %arg7: memref<32x32xf32, #tpu.memory_space<vmem>>, %arg8: memref<32x1xf32, #tpu.memory_space<vmem>>, %arg9: memref<32x1xf32, #tpu.memory_space<vmem>>, %arg10: memref<32x1xf32, #tpu.memory_space<vmem>>, %arg11: memref<16x32xf32, #tpu.memory_space<vmem>>, %arg12: memref<16x1xf32, #tpu.memory_space<vmem>>, %arg13: memref<16x1xf32, #tpu.memory_space<vmem>>, %arg14: memref<16x1xf32, #tpu.memory_space<vmem>>, %arg15: memref<8x16xf32, #tpu.memory_space<vmem>>, %arg16: memref<8x1xf32, #tpu.memory_space<vmem>>, %arg17: memref<8x1xf32, #tpu.memory_space<vmem>>, %arg18: memref<8x1xf32, #tpu.memory_space<vmem>>, %arg19: memref<8x1xf32, #tpu.memory_space<vmem>>, %arg20: memref<1x1xf32, #tpu.memory_space<vmem>>, %arg21: memref<1x384xf32, #tpu.memory_space<vmem>>) attributes {dimension_semantics = [#tpu.dimension_semantics<arbitrary>], iteration_bounds = array<i64: 1>, scalar_prefetch = 0 : i64, scratch_operands = 0 : i64, tpu.core_type = #tpu.core_type<tc>, window_params = [{pipeline_mode = #tpu.pipeline_mode<synchronous>, transform_indices = @transform_0, window_bounds = array<i64: 32, 384>}, {pipeline_mode = #tpu.pipeline_mode<synchronous>, transform_indices = @transform_1, window_bounds = array<i64: 32, 384>}, {pipeline_mode = #tpu.pipeline_mode<synchronous>, transform_indices = @transform_2, window_bounds = array<i64: 32, 384>}, {pipeline_mode = #tpu.pipeline_mode<synchronous>, transform_indices = @transform_3, window_bounds = array<i64: 32, 384>}, {pipeline_mode = #tpu.pipeline_mode<synchronous>, transform_indices = @transform_4, window_bounds = array<i64: 8, 384>}, {pipeline_mode = #tpu.pipeline_mode<synchronous>, transform_indices = @transform_5, window_bounds = array<i64: 32, 32>}, {pipeline_mode = #tpu.pipeline_mode<synchronous>, transform_indices = @transform_6, window_bounds = array<i64: 32, 32>}, {pipeline_mode = #tpu.pipeline_mode<synchronous>, transform_indices = @transform_7, window_bounds = array<i64: 32, 1>}, {pipeline_mode = #tpu.pipeline_mode<synchronous>, transform_indices = @transform_8, window_bounds = array<i64: 32, 1>}, {pipeline_mode = #tpu.pipeline_mode<synchronous>, transform_indices = @transform_9, window_bounds = array<i64: 32, 1>}, {pipeline_mode = #tpu.pipeline_mode<synchronous>, transform_indices = @transform_10, window_bounds = array<i64: 16, 32>}, {pipeline_mode = #tpu.pipeline_mode<synchronous>, transform_indices = @transform_11, window_bounds = array<i64: 16, 1>}, {pipeline_mode = #tpu.pipeline_mode<synchronous>, transform_indices = @transform_12, window_bounds = array<i64: 16, 1>}, {pipeline_mode = #tpu.pipeline_mode<synchronous>, transform_indices = @transform_13, window_bounds = array<i64: 16, 1>}, {pipeline_mode = #tpu.pipeline_mode<synchronous>, transform_indices = @transform_14, window_bounds = array<i64: 8, 16>}, {pipeline_mode = #tpu.pipeline_mode<synchronous>, transform_indices = @transform_15, window_bounds = array<i64: 8, 1>}, {pipeline_mode = #tpu.pipeline_mode<synchronous>, transform_indices = @transform_16, window_bounds = array<i64: 8, 1>}, {pipeline_mode = #tpu.pipeline_mode<synchronous>, transform_indices = @transform_17, window_bounds = array<i64: 8, 1>}, {pipeline_mode = #tpu.pipeline_mode<synchronous>, transform_indices = @transform_18, window_bounds = array<i64: 8, 1>}, {pipeline_mode = #tpu.pipeline_mode<synchronous>, transform_indices = @transform_19, window_bounds = array<i64: 1, 1>}, {pipeline_mode = #tpu.pipeline_mode<synchronous>, transform_indices = @transform_20, window_bounds = array<i64: 1, 384>}]} {
    %0 = tpu.iota {dimensions = array<i32: 1>} : vector<1x384xi32>
    %c300_i32 = arith.constant 300 : i32
    %1 = vector.broadcast %c300_i32 : i32 to vector<1x384xi32>
    %2 = arith.cmpi slt, %0, %1 : vector<1x384xi32>
    %3 = arith.extui %2 : vector<1x384xi1> to vector<1x384xi32>
    %4 = arith.sitofp %3 : vector<1x384xi32> to vector<1x384xf32>
    %c0 = arith.constant 0 : index
    %c0_0 = arith.constant 0 : index
    %5 = vector.load %arg5[%c0, %c0_0] : memref<8x384xf32, #tpu.memory_space<vmem>>, vector<8x384xf32>
    %6 = vector.extract_strided_slice %5 {offsets = [0, 0], sizes = [1, 384], strides = [1, 1]} : vector<8x384xf32> to vector<1x384xf32>
    %7 = vector.extract_strided_slice %5 {offsets = [1, 0], sizes = [1, 384], strides = [1, 1]} : vector<8x384xf32> to vector<1x384xf32>
    %8 = vector.extract_strided_slice %5 {offsets = [2, 0], sizes = [1, 384], strides = [1, 1]} : vector<8x384xf32> to vector<1x384xf32>
    %c0_1 = arith.constant 0 : index
    %c0_2 = arith.constant 0 : index
    %9 = vector.load %arg2[%c0_1, %c0_2] : memref<32x384xf32, #tpu.memory_space<vmem>>, vector<32x384xf32>
    %c0_3 = arith.constant 0 : index
    %c0_4 = arith.constant 0 : index
    %10 = vector.load %arg1[%c0_3, %c0_4] : memref<32x384xf32, #tpu.memory_space<vmem>>, vector<32x384xf32>
    %11 = vector.broadcast %6 : vector<1x384xf32> to vector<32x384xf32>
    %12 = arith.mulf %11, %9 : vector<32x384xf32>
    %13 = arith.addf %10, %12 : vector<32x384xf32>
    %c0_5 = arith.constant 0 : index
    %c0_6 = arith.constant 0 : index
    %14 = vector.load %arg3[%c0_5, %c0_6] : memref<32x384xf32, #tpu.memory_space<vmem>>, vector<32x384xf32>
    %c0_7 = arith.constant 0 : index
    %c0_8 = arith.constant 0 : index
    %15 = vector.load %arg4[%c0_7, %c0_8] : memref<32x384xf32, #tpu.memory_space<vmem>>, vector<32x384xf32>
    %16 = vector.broadcast %7 : vector<1x384xf32> to vector<32x384xf32>
    %17 = arith.mulf %16, %15 : vector<32x384xf32>
    %18 = arith.addf %14, %17 : vector<32x384xf32>
    %19 = vector.broadcast %8 : vector<1x384xf32> to vector<32x384xf32>
    %20 = arith.mulf %19, %9 : vector<32x384xf32>
    %21 = arith.addf %18, %20 : vector<32x384xf32>
    %c0_9 = arith.constant 0 : index
    %c0_10 = arith.constant 0 : index
    %22 = vector.load %arg6[%c0_9, %c0_10] : memref<32x32xf32, #tpu.memory_space<vmem>>, vector<32x32xf32>
    %cst = arith.constant dense<0.000000e+00> : vector<32x384xf32>
    %23 = tpu.matmul %22, %13, %cst {dimension_numbers = #tpu.dot_dimension_numbers<[1], [0], [0], [1], [0, 0, 1, 1], [], []>} : vector<32x32xf32>, vector<32x384xf32>, vector<32x384xf32> -> vector<32x384xf32>
    %c0_11 = arith.constant 0 : index
    %c0_12 = arith.constant 0 : index
    %24 = vector.load %arg7[%c0_11, %c0_12] : memref<32x32xf32, #tpu.memory_space<vmem>>, vector<32x32xf32>
    %cst_13 = arith.constant dense<0.000000e+00> : vector<32x384xf32>
    %25 = tpu.matmul %24, %21, %cst_13 {dimension_numbers = #tpu.dot_dimension_numbers<[1], [0], [0], [1], [0, 0, 1, 1], [], []>} : vector<32x32xf32>, vector<32x384xf32>, vector<32x384xf32> -> vector<32x384xf32>
    %26 = arith.addf %23, %25 : vector<32x384xf32>
    %c0_14 = arith.constant 0 : index
    %c0_15 = arith.constant 0 : index
    %27 = vector.load %arg8[%c0_14, %c0_15] : memref<32x1xf32, #tpu.memory_space<vmem>>, vector<32x1xf32>
    %28 = vector.broadcast %27 : vector<32x1xf32> to vector<32x384xf32>
    %29 = arith.addf %26, %28 : vector<32x384xf32>
    %cst_16 = arith.constant 0.000000e+00 : f32
    %30 = vector.broadcast %cst_16 : f32 to vector<32x384xf32>
    %31 = arith.maximumf %29, %30 : vector<32x384xf32>
    %c0_17 = arith.constant 0 : index
    %c0_18 = arith.constant 0 : index
    %32 = vector.load %arg9[%c0_17, %c0_18] : memref<32x1xf32, #tpu.memory_space<vmem>>, vector<32x1xf32>
    %c0_19 = arith.constant 0 : index
    %c0_20 = arith.constant 0 : index
    %33 = vector.load %arg10[%c0_19, %c0_20] : memref<32x1xf32, #tpu.memory_space<vmem>>, vector<32x1xf32>
    %34 = vector.broadcast %4 : vector<1x384xf32> to vector<32x384xf32>
    %35 = arith.mulf %31, %34 : vector<32x384xf32>
    %cst_21 = arith.constant dense<0.000000e+00> : vector<32xf32>
    %36 = vector.multi_reduction <add>, %35, %cst_21 [1] : vector<32x384xf32> to vector<32xf32>
    %37 = vector.shape_cast %36 : vector<32xf32> to vector<32x1xf32>
    %cst_22 = arith.constant 0.00333333341 : f32
    %38 = vector.broadcast %cst_22 : f32 to vector<32x1xf32>
    %39 = arith.mulf %37, %38 : vector<32x1xf32>
    %40 = vector.broadcast %39 : vector<32x1xf32> to vector<32x384xf32>
    %41 = arith.subf %31, %40 : vector<32x384xf32>
    %42 = vector.broadcast %4 : vector<1x384xf32> to vector<32x384xf32>
    %43 = arith.mulf %41, %42 : vector<32x384xf32>
    %44 = arith.mulf %43, %43 : vector<32x384xf32>
    %cst_23 = arith.constant dense<0.000000e+00> : vector<32xf32>
    %45 = vector.multi_reduction <add>, %44, %cst_23 [1] : vector<32x384xf32> to vector<32xf32>
    %46 = vector.shape_cast %45 : vector<32xf32> to vector<32x1xf32>
    %cst_24 = arith.constant 0.00333333341 : f32
    %47 = vector.broadcast %cst_24 : f32 to vector<32x1xf32>
    %48 = arith.mulf %46, %47 : vector<32x1xf32>
    %49 = vector.broadcast %39 : vector<32x1xf32> to vector<32x384xf32>
    %50 = arith.subf %31, %49 : vector<32x384xf32>
    %cst_25 = arith.constant 9.99999974E-6 : f32
    %51 = vector.broadcast %cst_25 : f32 to vector<32x1xf32>
    %52 = arith.addf %48, %51 : vector<32x1xf32>
    %53 = math.rsqrt %52 : vector<32x1xf32>
    %54 = vector.broadcast %53 : vector<32x1xf32> to vector<32x384xf32>
    %55 = arith.mulf %50, %54 : vector<32x384xf32>
    %56 = vector.broadcast %32 : vector<32x1xf32> to vector<32x384xf32>
    %57 = arith.mulf %55, %56 : vector<32x384xf32>
    %58 = vector.broadcast %33 : vector<32x1xf32> to vector<32x384xf32>
    %59 = arith.addf %57, %58 : vector<32x384xf32>
    %c0_26 = arith.constant 0 : index
    %c0_27 = arith.constant 0 : index
    %60 = vector.load %arg11[%c0_26, %c0_27] : memref<16x32xf32, #tpu.memory_space<vmem>>, vector<16x32xf32>
    %cst_28 = arith.constant dense<0.000000e+00> : vector<16x384xf32>
    %61 = tpu.matmul %60, %59, %cst_28 {dimension_numbers = #tpu.dot_dimension_numbers<[1], [0], [0], [1], [0, 0, 1, 1], [], []>} : vector<16x32xf32>, vector<32x384xf32>, vector<16x384xf32> -> vector<16x384xf32>
    %c0_29 = arith.constant 0 : index
    %c0_30 = arith.constant 0 : index
    %62 = vector.load %arg12[%c0_29, %c0_30] : memref<16x1xf32, #tpu.memory_space<vmem>>, vector<16x1xf32>
    %63 = vector.broadcast %62 : vector<16x1xf32> to vector<16x384xf32>
    %64 = arith.addf %61, %63 : vector<16x384xf32>
    %cst_31 = arith.constant 0.000000e+00 : f32
    %65 = vector.broadcast %cst_31 : f32 to vector<16x384xf32>
    %66 = arith.maximumf %64, %65 : vector<16x384xf32>
    %c0_32 = arith.constant 0 : index
    %c0_33 = arith.constant 0 : index
    %67 = vector.load %arg13[%c0_32, %c0_33] : memref<16x1xf32, #tpu.memory_space<vmem>>, vector<16x1xf32>
    %c0_34 = arith.constant 0 : index
    %c0_35 = arith.constant 0 : index
    %68 = vector.load %arg14[%c0_34, %c0_35] : memref<16x1xf32, #tpu.memory_space<vmem>>, vector<16x1xf32>
    %69 = vector.broadcast %4 : vector<1x384xf32> to vector<16x384xf32>
    %70 = arith.mulf %66, %69 : vector<16x384xf32>
    %cst_36 = arith.constant dense<0.000000e+00> : vector<16xf32>
    %71 = vector.multi_reduction <add>, %70, %cst_36 [1] : vector<16x384xf32> to vector<16xf32>
    %72 = vector.shape_cast %71 : vector<16xf32> to vector<16x1xf32>
    %cst_37 = arith.constant 0.00333333341 : f32
    %73 = vector.broadcast %cst_37 : f32 to vector<16x1xf32>
    %74 = arith.mulf %72, %73 : vector<16x1xf32>
    %75 = vector.broadcast %74 : vector<16x1xf32> to vector<16x384xf32>
    %76 = arith.subf %66, %75 : vector<16x384xf32>
    %77 = vector.broadcast %4 : vector<1x384xf32> to vector<16x384xf32>
    %78 = arith.mulf %76, %77 : vector<16x384xf32>
    %79 = arith.mulf %78, %78 : vector<16x384xf32>
    %cst_38 = arith.constant dense<0.000000e+00> : vector<16xf32>
    %80 = vector.multi_reduction <add>, %79, %cst_38 [1] : vector<16x384xf32> to vector<16xf32>
    %81 = vector.shape_cast %80 : vector<16xf32> to vector<16x1xf32>
    %cst_39 = arith.constant 0.00333333341 : f32
    %82 = vector.broadcast %cst_39 : f32 to vector<16x1xf32>
    %83 = arith.mulf %81, %82 : vector<16x1xf32>
    %84 = vector.broadcast %74 : vector<16x1xf32> to vector<16x384xf32>
    %85 = arith.subf %66, %84 : vector<16x384xf32>
    %cst_40 = arith.constant 9.99999974E-6 : f32
    %86 = vector.broadcast %cst_40 : f32 to vector<16x1xf32>
    %87 = arith.addf %83, %86 : vector<16x1xf32>
    %88 = math.rsqrt %87 : vector<16x1xf32>
    %89 = vector.broadcast %88 : vector<16x1xf32> to vector<16x384xf32>
    %90 = arith.mulf %85, %89 : vector<16x384xf32>
    %91 = vector.broadcast %67 : vector<16x1xf32> to vector<16x384xf32>
    %92 = arith.mulf %90, %91 : vector<16x384xf32>
    %93 = vector.broadcast %68 : vector<16x1xf32> to vector<16x384xf32>
    %94 = arith.addf %92, %93 : vector<16x384xf32>
    %c0_41 = arith.constant 0 : index
    %c0_42 = arith.constant 0 : index
    %95 = vector.load %arg15[%c0_41, %c0_42] : memref<8x16xf32, #tpu.memory_space<vmem>>, vector<8x16xf32>
    %cst_43 = arith.constant dense<0.000000e+00> : vector<8x384xf32>
    %96 = tpu.matmul %95, %94, %cst_43 {dimension_numbers = #tpu.dot_dimension_numbers<[1], [0], [0], [1], [0, 0, 1, 1], [], []>} : vector<8x16xf32>, vector<16x384xf32>, vector<8x384xf32> -> vector<8x384xf32>
    %c0_44 = arith.constant 0 : index
    %c0_45 = arith.constant 0 : index
    %97 = vector.load %arg16[%c0_44, %c0_45] : memref<8x1xf32, #tpu.memory_space<vmem>>, vector<8x1xf32>
    %98 = vector.broadcast %97 : vector<8x1xf32> to vector<8x384xf32>
    %99 = arith.addf %96, %98 : vector<8x384xf32>
    %cst_46 = arith.constant 0.000000e+00 : f32
    %100 = vector.broadcast %cst_46 : f32 to vector<8x384xf32>
    %101 = arith.maximumf %99, %100 : vector<8x384xf32>
    %c0_47 = arith.constant 0 : index
    %c0_48 = arith.constant 0 : index
    %102 = vector.load %arg17[%c0_47, %c0_48] : memref<8x1xf32, #tpu.memory_space<vmem>>, vector<8x1xf32>
    %c0_49 = arith.constant 0 : index
    %c0_50 = arith.constant 0 : index
    %103 = vector.load %arg18[%c0_49, %c0_50] : memref<8x1xf32, #tpu.memory_space<vmem>>, vector<8x1xf32>
    %104 = vector.broadcast %4 : vector<1x384xf32> to vector<8x384xf32>
    %105 = arith.mulf %101, %104 : vector<8x384xf32>
    %cst_51 = arith.constant dense<0.000000e+00> : vector<8xf32>
    %106 = vector.multi_reduction <add>, %105, %cst_51 [1] : vector<8x384xf32> to vector<8xf32>
    %107 = vector.shape_cast %106 : vector<8xf32> to vector<8x1xf32>
    %cst_52 = arith.constant 0.00333333341 : f32
    %108 = vector.broadcast %cst_52 : f32 to vector<8x1xf32>
    %109 = arith.mulf %107, %108 : vector<8x1xf32>
    %110 = vector.broadcast %109 : vector<8x1xf32> to vector<8x384xf32>
    %111 = arith.subf %101, %110 : vector<8x384xf32>
    %112 = vector.broadcast %4 : vector<1x384xf32> to vector<8x384xf32>
    %113 = arith.mulf %111, %112 : vector<8x384xf32>
    %114 = arith.mulf %113, %113 : vector<8x384xf32>
    %cst_53 = arith.constant dense<0.000000e+00> : vector<8xf32>
    %115 = vector.multi_reduction <add>, %114, %cst_53 [1] : vector<8x384xf32> to vector<8xf32>
    %116 = vector.shape_cast %115 : vector<8xf32> to vector<8x1xf32>
    %cst_54 = arith.constant 0.00333333341 : f32
    %117 = vector.broadcast %cst_54 : f32 to vector<8x1xf32>
    %118 = arith.mulf %116, %117 : vector<8x1xf32>
    %119 = vector.broadcast %109 : vector<8x1xf32> to vector<8x384xf32>
    %120 = arith.subf %101, %119 : vector<8x384xf32>
    %cst_55 = arith.constant 9.99999974E-6 : f32
    %121 = vector.broadcast %cst_55 : f32 to vector<8x1xf32>
    %122 = arith.addf %118, %121 : vector<8x1xf32>
    %123 = math.rsqrt %122 : vector<8x1xf32>
    %124 = vector.broadcast %123 : vector<8x1xf32> to vector<8x384xf32>
    %125 = arith.mulf %120, %124 : vector<8x384xf32>
    %126 = vector.broadcast %102 : vector<8x1xf32> to vector<8x384xf32>
    %127 = arith.mulf %125, %126 : vector<8x384xf32>
    %128 = vector.broadcast %103 : vector<8x1xf32> to vector<8x384xf32>
    %129 = arith.addf %127, %128 : vector<8x384xf32>
    %c0_56 = arith.constant 0 : index
    %c0_57 = arith.constant 0 : index
    %130 = vector.load %arg19[%c0_56, %c0_57] : memref<8x1xf32, #tpu.memory_space<vmem>>, vector<8x1xf32>
    %131 = vector.broadcast %130 : vector<8x1xf32> to vector<8x384xf32>
    %132 = arith.mulf %129, %131 : vector<8x384xf32>
    %cst_58 = arith.constant dense<0.000000e+00> : vector<384xf32>
    %133 = vector.multi_reduction <add>, %132, %cst_58 [0] : vector<8x384xf32> to vector<384xf32>
    %134 = vector.shape_cast %133 : vector<384xf32> to vector<1x384xf32>
    %c0_59 = arith.constant 0 : index
    %c0_60 = arith.constant 0 : index
    %135 = vector.load %arg20[%c0_59, %c0_60] : memref<1x1xf32, #tpu.memory_space<vmem>>, vector<1x1xf32>
    %136 = vector.broadcast %135 : vector<1x1xf32> to vector<1x384xf32>
    %137 = arith.addf %134, %136 : vector<1x384xf32>
    %138 = arith.negf %137 : vector<1x384xf32>
    %139 = math.exp %138 : vector<1x384xf32>
    %cst_61 = arith.constant 1.000000e+00 : f32
    %140 = vector.broadcast %cst_61 : f32 to vector<1x384xf32>
    %141 = arith.addf %140, %139 : vector<1x384xf32>
    %142 = arith.divf %140, %141 : vector<1x384xf32>
    %c0_62 = arith.constant 0 : index
    %c0_63 = arith.constant 0 : index
    %143 = vector.load %arg21[%c0_62, %c0_63] : memref<1x384xf32, #tpu.memory_space<vmem>>, vector<1x384xf32>
    tpu.vector_store %arg21[%c0_62, %c0_63], %142 {strides = array<i32>} : memref<1x384xf32, #tpu.memory_space<vmem>>, vector<1x384xf32>,
    return
  }
  func.func @transform_0(%arg0: i32) -> (i32, i32) {
    %c0_i32 = arith.constant 0 : i32
    %c0_i32_0 = arith.constant 0 : i32
    %c0_i32_1 = arith.constant 0 : i32
    return %c0_i32, %c0_i32_0 : i32, i32
  }
  func.func @transform_1(%arg0: i32) -> (i32, i32) {
    %c0_i32 = arith.constant 0 : i32
    %c0_i32_0 = arith.constant 0 : i32
    %c0_i32_1 = arith.constant 0 : i32
    return %c0_i32, %c0_i32_0 : i32, i32
  }
  func.func @transform_2(%arg0: i32) -> (i32, i32) {
    %c0_i32 = arith.constant 0 : i32
    %c0_i32_0 = arith.constant 0 : i32
    %c0_i32_1 = arith.constant 0 : i32
    return %c0_i32, %c0_i32_0 : i32, i32
  }
  func.func @transform_3(%arg0: i32) -> (i32, i32) {
    %c0_i32 = arith.constant 0 : i32
    %c0_i32_0 = arith.constant 0 : i32
    %c0_i32_1 = arith.constant 0 : i32
    return %c0_i32, %c0_i32_0 : i32, i32
  }
  func.func @transform_4(%arg0: i32) -> (i32, i32) {
    %c0_i32 = arith.constant 0 : i32
    %c0_i32_0 = arith.constant 0 : i32
    %c0_i32_1 = arith.constant 0 : i32
    return %c0_i32, %c0_i32_0 : i32, i32
  }
  func.func @transform_5(%arg0: i32) -> (i32, i32) {
    %c0_i32 = arith.constant 0 : i32
    %c0_i32_0 = arith.constant 0 : i32
    %c0_i32_1 = arith.constant 0 : i32
    return %c0_i32, %c0_i32_0 : i32, i32
  }
  func.func @transform_6(%arg0: i32) -> (i32, i32) {
    %c0_i32 = arith.constant 0 : i32
    %c0_i32_0 = arith.constant 0 : i32
    %c0_i32_1 = arith.constant 0 : i32
    return %c0_i32, %c0_i32_0 : i32, i32
  }
  func.func @transform_7(%arg0: i32) -> (i32, i32) {
    %c0_i32 = arith.constant 0 : i32
    %c0_i32_0 = arith.constant 0 : i32
    %c0_i32_1 = arith.constant 0 : i32
    return %c0_i32, %c0_i32_0 : i32, i32
  }
  func.func @transform_8(%arg0: i32) -> (i32, i32) {
    %c0_i32 = arith.constant 0 : i32
    %c0_i32_0 = arith.constant 0 : i32
    %c0_i32_1 = arith.constant 0 : i32
    return %c0_i32, %c0_i32_0 : i32, i32
  }
  func.func @transform_9(%arg0: i32) -> (i32, i32) {
    %c0_i32 = arith.constant 0 : i32
    %c0_i32_0 = arith.constant 0 : i32
    %c0_i32_1 = arith.constant 0 : i32
    return %c0_i32, %c0_i32_0 : i32, i32
  }
  func.func @transform_10(%arg0: i32) -> (i32, i32) {
    %c0_i32 = arith.constant 0 : i32
    %c0_i32_0 = arith.constant 0 : i32
    %c0_i32_1 = arith.constant 0 : i32
    return %c0_i32, %c0_i32_0 : i32, i32
  }
  func.func @transform_11(%arg0: i32) -> (i32, i32) {
    %c0_i32 = arith.constant 0 : i32
    %c0_i32_0 = arith.constant 0 : i32
    %c0_i32_1 = arith.constant 0 : i32
    return %c0_i32, %c0_i32_0 : i32, i32
  }
  func.func @transform_12(%arg0: i32) -> (i32, i32) {
    %c0_i32 = arith.constant 0 : i32
    %c0_i32_0 = arith.constant 0 : i32
    %c0_i32_1 = arith.constant 0 : i32
    return %c0_i32, %c0_i32_0 : i32, i32
  }
  func.func @transform_13(%arg0: i32) -> (i32, i32) {
    %c0_i32 = arith.constant 0 : i32
    %c0_i32_0 = arith.constant 0 : i32
    %c0_i32_1 = arith.constant 0 : i32
    return %c0_i32, %c0_i32_0 : i32, i32
  }
  func.func @transform_14(%arg0: i32) -> (i32, i32) {
    %c0_i32 = arith.constant 0 : i32
    %c0_i32_0 = arith.constant 0 : i32
    %c0_i32_1 = arith.constant 0 : i32
    return %c0_i32, %c0_i32_0 : i32, i32
  }
  func.func @transform_15(%arg0: i32) -> (i32, i32) {
    %c0_i32 = arith.constant 0 : i32
    %c0_i32_0 = arith.constant 0 : i32
    %c0_i32_1 = arith.constant 0 : i32
    return %c0_i32, %c0_i32_0 : i32, i32
  }
  func.func @transform_16(%arg0: i32) -> (i32, i32) {
    %c0_i32 = arith.constant 0 : i32
    %c0_i32_0 = arith.constant 0 : i32
    %c0_i32_1 = arith.constant 0 : i32
    return %c0_i32, %c0_i32_0 : i32, i32
  }
  func.func @transform_17(%arg0: i32) -> (i32, i32) {
    %c0_i32 = arith.constant 0 : i32
    %c0_i32_0 = arith.constant 0 : i32
    %c0_i32_1 = arith.constant 0 : i32
    return %c0_i32, %c0_i32_0 : i32, i32
  }
  func.func @transform_18(%arg0: i32) -> (i32, i32) {
    %c0_i32 = arith.constant 0 : i32
    %c0_i32_0 = arith.constant 0 : i32
    %c0_i32_1 = arith.constant 0 : i32
    return %c0_i32, %c0_i32_0 : i32, i32
  }
  func.func @transform_19(%arg0: i32) -> (i32, i32) {
    %c0_i32 = arith.constant 0 : i32
    %c0_i32_0 = arith.constant 0 : i32
    %c0_i32_1 = arith.constant 0 : i32
    return %c0_i32, %c0_i32_0 : i32, i32
  }
  func.func @transform_20(%arg0: i32) -> (i32, i32) {
    %c0_i32 = arith.constant 0 : i32
    %c0_i32_0 = arith.constant 0 : i32
    %c0_i32_1 = arith.constant 0 : i32
    return %c0_i32, %c0_i32_0 : i32, i32
  }
}

</mosaic_0001>

<llo_original>
// kernel: cdr_sb_forward.1
$region0: #{cdr_sb_forward.1}
  #allocation0 [shape = 'u32[]', space=smem, size = 0x4, offset = 0x4, fixed_abs, tag = 'smem constant byte address 0x4 - core index']
  #allocation1 [shape = 'u32[72,128]{1,0:T(1,128)}', space=vmem, size = 0x9000, scoped, tag = 'internal scratch']
  #allocation2 [shape = 'f32[1,1]{1,0:T(1,128)S(1)}', space=vmem, size = 0x200, scoped, tag = 'scoped memory for cdr_sb_forward.1']
  %s0 = inlined_call_operand.vmem [shape: f32[32,384], index: 0, kind: input, shape index: {}]
  %s1 = inlined_call_operand.vmem [shape: f32[32,384], index: 1, kind: input, shape index: {}]
  %s2 = inlined_call_operand.vmem [shape: f32[32,384], index: 2, kind: input, shape index: {}]
  %s3 = inlined_call_operand.vmem [shape: f32[32,384], index: 3, kind: input, shape index: {}]
  %s4 = inlined_call_operand.vmem [shape: f32[8,384], index: 4, kind: input, shape index: {}]
  %s5 = inlined_call_operand.vmem [shape: f32[32,32], index: 5, kind: input, shape index: {}]
  %s6 = inlined_call_operand.vmem [shape: f32[32,32], index: 6, kind: input, shape index: {}]
  %s7 = inlined_call_operand.vmem [shape: f32[32,1], index: 7, kind: input, shape index: {}]
  %s8 = inlined_call_operand.vmem [shape: f32[32,1], index: 8, kind: input, shape index: {}]
  %s9 = inlined_call_operand.vmem [shape: f32[32,1], index: 9, kind: input, shape index: {}]
  %s10 = inlined_call_operand.vmem [shape: f32[16,32], index: 10, kind: input, shape index: {}]
  %s11 = inlined_call_operand.vmem [shape: f32[16,1], index: 11, kind: input, shape index: {}]
  %s12 = inlined_call_operand.vmem [shape: f32[16,1], index: 12, kind: input, shape index: {}]
  %s13 = inlined_call_operand.vmem [shape: f32[16,1], index: 13, kind: input, shape index: {}]
  %s14 = inlined_call_operand.vmem [shape: f32[8,16], index: 14, kind: input, shape index: {}]
  %s15 = inlined_call_operand.vmem [shape: f32[8,1], index: 15, kind: input, shape index: {}]
  %s16 = inlined_call_operand.vmem [shape: f32[8,1], index: 16, kind: input, shape index: {}]
  %s17 = inlined_call_operand.vmem [shape: f32[8,1], index: 17, kind: input, shape index: {}]
  %s18 = inlined_call_operand.vmem [shape: f32[8,1], index: 18, kind: input, shape index: {}]
  %s19 = inlined_call_operand.<no memory space> [shape: f32[1,1], index: 19, kind: input, shape index: {}]
  %s20 = inlined_call_operand.vmem [shape: f32[1,384], index: 20, kind: output, shape index: {}]
  %s21 = sld [smem:[#allocation0]]
  $region90: #{cdr_sb_forward.1} parent=0
    _
  %s23 = ssub.s32 1, %s21
  %s24 = scalar_select 0, %s23, %s21
  %v25 = vstv %s19
  %26 = vst [vmem:[#allocation2] sm:$0x1] %v25
  // Predicated region
  $region2: #{cdr_sb_forward.1} parent=0 // pred_check
    _
  $region3: #{cdr_sb_forward.1} parent=0 // pred_check_branch
    %28 = sbr.rel (0) target = $region5
  $region4: #{cdr_sb_forward.1} parent=0 // pred_region
    _
  $region5: #{cdr_sb_forward.1} parent=0 // pred_fallthru
    _
  // Predicated region
  $region6: #{cdr_sb_forward.1} parent=0 // pred_check
    _
  $region7: #{cdr_sb_forward.1} parent=0 // pred_check_branch
    %30 = sbr.rel (0) target = $region9
  $region8: #{cdr_sb_forward.1} parent=0 // pred_region
    _
  $region9: #{cdr_sb_forward.1} parent=0 // pred_fallthru
    _
  // Predicated region
  $region10: #{cdr_sb_forward.1} parent=0 // pred_check
    _
  $region11: #{cdr_sb_forward.1} parent=0 // pred_check_branch
    %32 = sbr.rel (0) target = $region13
  $region12: #{cdr_sb_forward.1} parent=0 // pred_region
    _
  $region13: #{cdr_sb_forward.1} parent=0 // pred_fallthru
    _
  // Predicated region
  $region14: #{cdr_sb_forward.1} parent=0 // pred_check
    _
  $region15: #{cdr_sb_forward.1} parent=0 // pred_check_branch
    %34 = sbr.rel (0) target = $region17
  $region16: #{cdr_sb_forward.1} parent=0 // pred_region
    _
  $region17: #{cdr_sb_forward.1} parent=0 // pred_fallthru
    _
  // Predicated region
  $region18: #{cdr_sb_forward.1} parent=0 // pred_check
    _
  $region19: #{cdr_sb_forward.1} parent=0 // pred_check_branch
    %36 = sbr.rel (0) target = $region21
  $region20: #{cdr_sb_forward.1} parent=0 // pred_region
    _
  $region21: #{cdr_sb_forward.1} parent=0 // pred_fallthru
    _
  // Predicated region
  $region22: #{cdr_sb_forward.1} parent=0 // pred_check
    _
  $region23: #{cdr_sb_forward.1} parent=0 // pred_check_branch
    %38 = sbr.rel (0) target = $region25
  $region24: #{cdr_sb_forward.1} parent=0 // pred_region
    _
  $region25: #{cdr_sb_forward.1} parent=0 // pred_fallthru
    _
  // Predicated region
  $region26: #{cdr_sb_forward.1} parent=0 // pred_check
    _
  $region27: #{cdr_sb_forward.1} parent=0 // pred_check_branch
    %40 = sbr.rel (0) target = $region29
  $region28: #{cdr_sb_forward.1} parent=0 // pred_region
    _
  $region29: #{cdr_sb_forward.1} parent=0 // pred_fallthru
    _
  // Predicated region
  $region30: #{cdr_sb_forward.1} parent=0 // pred_check
    _
  $region31: #{cdr_sb_forward.1} parent=0 // pred_check_branch
    %42 = sbr.rel (0) target = $region33
  $region32: #{cdr_sb_forward.1} parent=0 // pred_region
    _
  $region33: #{cdr_sb_forward.1} parent=0 // pred_fallthru
    _
  // Predicated region
  $region34: #{cdr_sb_forward.1} parent=0 // pred_check
    _
  $region35: #{cdr_sb_forward.1} parent=0 // pred_check_branch
    %44 = sbr.rel (0) target = $region37
  $region36: #{cdr_sb_forward.1} parent=0 // pred_region
    _
  $region37: #{cdr_sb_forward.1} parent=0 // pred_fallthru
    _
  // Predicated region
  $region38: #{cdr_sb_forward.1} parent=0 // pred_check
    _
  $region39: #{cdr_sb_forward.1} parent=0 // pred_check_branch
    %46 = sbr.rel (0) target = $region41
  $region40: #{cdr_sb_forward.1} parent=0 // pred_region
    _
  $region41: #{cdr_sb_forward.1} parent=0 // pred_fallthru
    _
  // Predicated region
  $region42: #{cdr_sb_forward.1} parent=0 // pred_check
    _
  $region43: #{cdr_sb_forward.1} parent=0 // pred_check_branch
    %48 = sbr.rel (0) target = $region45
  $region44: #{cdr_sb_forward.1} parent=0 // pred_region
    _
  $region45: #{cdr_sb_forward.1} parent=0 // pred_fallthru
    _
  // Predicated region
  $region46: #{cdr_sb_forward.1} parent=0 // pred_check
    _
  $region47: #{cdr_sb_forward.1} parent=0 // pred_check_branch
    %50 = sbr.rel (0) target = $region49
  $region48: #{cdr_sb_forward.1} parent=0 // pred_region
    _
  $region49: #{cdr_sb_forward.1} parent=0 // pred_fallthru
    _
  // Predicated region
  $region50: #{cdr_sb_forward.1} parent=0 // pred_check
    _
  $region51: #{cdr_sb_forward.1} parent=0 // pred_check_branch
    %52 = sbr.rel (0) target = $region53
  $region52: #{cdr_sb_forward.1} parent=0 // pred_region
    _
  $region53: #{cdr_sb_forward.1} parent=0 // pred_fallthru
    _
  // Predicated region
  $region54: #{cdr_sb_forward.1} parent=0 // pred_check
    _
  $region55: #{cdr_sb_forward.1} parent=0 // pred_check_branch
    %54 = sbr.rel (0) target = $region57
  $region56: #{cdr_sb_forward.1} parent=0 // pred_region
    _
  $region57: #{cdr_sb_forward.1} parent=0 // pred_fallthru
    _
  // Predicated region
  $region58: #{cdr_sb_forward.1} parent=0 // pred_check
    _
  $region59: #{cdr_sb_forward.1} parent=0 // pred_check_branch
    %56 = sbr.rel (0) target = $region61
  $region60: #{cdr_sb_forward.1} parent=0 // pred_region
    _
  $region61: #{cdr_sb_forward.1} parent=0 // pred_fallthru
    _
  // Predicated region
  $region62: #{cdr_sb_forward.1} parent=0 // pred_check
    _
  $region63: #{cdr_sb_forward.1} parent=0 // pred_check_branch
    %58 = sbr.rel (0) target = $region65
  $region64: #{cdr_sb_forward.1} parent=0 // pred_region
    _
  $region65: #{cdr_sb_forward.1} parent=0 // pred_fallthru
    _
  // Predicated region
  $region66: #{cdr_sb_forward.1} parent=0 // pred_check
    _
  $region67: #{cdr_sb_forward.1} parent=0 // pred_check_branch
    %60 = sbr.rel (0) target = $region69
  $region68: #{cdr_sb_forward.1} parent=0 // pred_region
    _
  $region69: #{cdr_sb_forward.1} parent=0 // pred_fallthru
    _
  // Predicated region
  $region70: #{cdr_sb_forward.1} parent=0 // pred_check
    _
  $region71: #{cdr_sb_forward.1} parent=0 // pred_check_branch
    %62 = sbr.rel (0) target = $region73
  $region72: #{cdr_sb_forward.1} parent=0 // pred_region
    _
  $region73: #{cdr_sb_forward.1} parent=0 // pred_fallthru
    _
  // Predicated region
  $region74: #{cdr_sb_forward.1} parent=0 // pred_check
    _
  $region75: #{cdr_sb_forward.1} parent=0 // pred_check_branch
    %64 = sbr.rel (0) target = $region77
  $region76: #{cdr_sb_forward.1} parent=0 // pred_region
    _
  $region77: #{cdr_sb_forward.1} parent=0 // pred_fallthru
    _
  // Predicated region
  $region78: #{cdr_sb_forward.1} parent=0 // pred_check
    _
  $region79: #{cdr_sb_forward.1} parent=0 // pred_check_branch
    %66 = sbr.rel (0) target = $region81
  $region80: #{cdr_sb_forward.1} parent=0 // pred_region
    _
  $region81: #{cdr_sb_forward.1} parent=0 // pred_fallthru
    _
  %v67 = vlaneseq
  %v68 = vand.u32 %v67, 127
  %v69 = vadd.s32 %v68, 128
  %v70 = vadd.s32 %v68, 256
  %vm71 = vcmp.lt.s32.totalorder %v68, 300
  %vm72 = vcmp.lt.s32.totalorder %v69, 300
  %vm73 = vcmp.lt.s32.totalorder %v70, 300
  %v74 = vsel %vm71, 1, 0
  %v75 = vsel %vm72, 1, 0
  %v76 = vsel %vm73, 1, 0
  %v77 = vcvt.s32.f32 %v74
  %v78 = vcvt.s32.f32 %v75
  %v79 = vcvt.s32.f32 %v76
  %v80 = vld [vmem:[%s4] sm:$0xff]
  %v81 = vld [vmem:[%s4 + $0x8] sm:$0xff]
  %v82 = vld [vmem:[%s4 + $0x10] sm:$0xff]
  %v83 = vld [vmem:[%s1] sm:$0xff]
  %v84 = vld [vmem:[%s1 + $0x8] sm:$0xff]
  %v85 = vld [vmem:[%s1 + $0x10] sm:$0xff]
  %v86 = vld [vmem:[%s1 + $0x18] sm:$0xff]
  %v87 = vld [vmem:[%s1 + $0x20] sm:$0xff]
  %v88 = vld [vmem:[%s1 + $0x28] sm:$0xff]
  %v89 = vld [vmem:[%s1 + $0x30] sm:$0xff]
  %v90 = vld [vmem:[%s1 + $0x38] sm:$0xff]
  %v91 = vld [vmem:[%s1 + $0x40] sm:$0xff]
  %v92 = vld [vmem:[%s1 + $0x48] sm:$0xff]
  %v93 = vld [vmem:[%s1 + $0x50] sm:$0xff]
  %v94 = vld [vmem:[%s1 + $0x58] sm:$0xff]
  %v95 = vld [vmem:[%s0] sm:$0xff]
  %v96 = vld [vmem:[%s0 + $0x8] sm:$0xff]
  %v97 = vld [vmem:[%s0 + $0x10] sm:$0xff]
  %v98 = vld [vmem:[%s0 + $0x18] sm:$0xff]
  %v99 = vld [vmem:[%s0 + $0x20] sm:$0xff]
  %v100 = vld [vmem:[%s0 + $0x28] sm:$0xff]
  %v101 = vld [vmem:[%s0 + $0x30] sm:$0xff]
  %v102 = vld [vmem:[%s0 + $0x38] sm:$0xff]
  %v103 = vld [vmem:[%s0 + $0x40] sm:$0xff]
  %v104 = vld [vmem:[%s0 + $0x48] sm:$0xff]
  %v105 = vld [vmem:[%s0 + $0x50] sm:$0xff]
  %v106 = vld [vmem:[%s0 + $0x58] sm:$0xff]
  %v107 = vperm.slane %v80, 0
  %v108 = vperm.slane %v81, 0
  %v109 = vperm.slane %v82, 0
  %v110 = vmul.f32 %v107, %v83
  %v111 = vmul.f32 %v108, %v84
  %v112 = vmul.f32 %v109, %v85
  %v113 = vmul.f32 %v107, %v86
  %v114 = vmul.f32 %v108, %v87
  %v115 = vmul.f32 %v109, %v88
  %v116 = vmul.f32 %v107, %v89
  %v117 = vmul.f32 %v108, %v90
  %v118 = vmul.f32 %v109, %v91
  %v119 = vmul.f32 %v107, %v92
  %v120 = vmul.f32 %v108, %v93
  %v121 = vmul.f32 %v109, %v94
  %v122 = vadd.f32 %v95, %v110
  %v123 = vadd.f32 %v96, %v111
  %v124 = vadd.f32 %v97, %v112
  %v125 = vadd.f32 %v98, %v113
  %v126 = vadd.f32 %v99, %v114
  %v127 = vadd.f32 %v100, %v115
  %v128 = vadd.f32 %v101, %v116
  %v129 = vadd.f32 %v102, %v117
  %v130 = vadd.f32 %v103, %v118
  %v131 = vadd.f32 %v104, %v119
  %v132 = vadd.f32 %v105, %v120
  %v133 = vadd.f32 %v106, %v121
  %v134 = vld [vmem:[%s2] sm:$0xff]
  %v135 = vld [vmem:[%s2 + $0x8] sm:$0xff]
  %v136 = vld [vmem:[%s2 + $0x10] sm:$0xff]
  %v137 = vld [vmem:[%s2 + $0x18] sm:$0xff]
  %v138 = vld [vmem:[%s2 + $0x20] sm:$0xff]
  %v139 = vld [vmem:[%s2 + $0x28] sm:$0xff]
  %v140 = vld [vmem:[%s2 + $0x30] sm:$0xff]
  %v141 = vld [vmem:[%s2 + $0x38] sm:$0xff]
  %v142 = vld [vmem:[%s2 + $0x40] sm:$0xff]
  %v143 = vld [vmem:[%s2 + $0x48] sm:$0xff]
  %v144 = vld [vmem:[%s2 + $0x50] sm:$0xff]
  %v145 = vld [vmem:[%s2 + $0x58] sm:$0xff]
  %v146 = vld [vmem:[%s3] sm:$0xff]
  %v147 = vld [vmem:[%s3 + $0x8] sm:$0xff]
  %v148 = vld [vmem:[%s3 + $0x10] sm:$0xff]
  %v149 = vld [vmem:[%s3 + $0x18] sm:$0xff]
  %v150 = vld [vmem:[%s3 + $0x20] sm:$0xff]
  %v151 = vld [vmem:[%s3 + $0x28] sm:$0xff]
  %v152 = vld [vmem:[%s3 + $0x30] sm:$0xff]
  %v153 = vld [vmem:[%s3 + $0x38] sm:$0xff]
  %v154 = vld [vmem:[%s3 + $0x40] sm:$0xff]
  %v155 = vld [vmem:[%s3 + $0x48] sm:$0xff]
  %v156 = vld [vmem:[%s3 + $0x50] sm:$0xff]
  %v157 = vld [vmem:[%s3 + $0x58] sm:$0xff]
  %v158 = vperm.slane %v80, 1
  %v159 = vperm.slane %v81, 1
  %v160 = vperm.slane %v82, 1
  %v161 = vmul.f32 %v158, %v146
  %v162 = vmul.f32 %v159, %v147
  %v163 = vmul.f32 %v160, %v148
  %v164 = vmul.f32 %v158, %v149
  %v165 = vmul.f32 %v159, %v150
  %v166 = vmul.f32 %v160, %v151
  %v167 = vmul.f32 %v158, %v152
  %v168 = vmul.f32 %v159, %v153
  %v169 = vmul.f32 %v160, %v154
  %v170 = vmul.f32 %v158, %v155
  %v171 = vmul.f32 %v159, %v156
  %v172 = vmul.f32 %v160, %v157
  %v173 = vadd.f32 %v134, %v161
  %v174 = vadd.f32 %v135, %v162
  %v175 = vadd.f32 %v136, %v163
  %v176 = vadd.f32 %v137, %v164
  %v177 = vadd.f32 %v138, %v165
  %v178 = vadd.f32 %v139, %v166
  %v179 = vadd.f32 %v140, %v167
  %v180 = vadd.f32 %v141, %v168
  %v181 = vadd.f32 %v142, %v169
  %v182 = vadd.f32 %v143, %v170
  %v183 = vadd.f32 %v144, %v171
  %v184 = vadd.f32 %v145, %v172
  %v185 = vperm.slane %v80, 2
  %v186 = vperm.slane %v81, 2
  %v187 = vperm.slane %v82, 2
  %v188 = vmul.f32 %v185, %v83
  %v189 = vmul.f32 %v186, %v84
  %v190 = vmul.f32 %v187, %v85
  %v191 = vmul.f32 %v185, %v86
  %v192 = vmul.f32 %v186, %v87
  %v193 = vmul.f32 %v187, %v88
  %v194 = vmul.f32 %v185, %v89
  %v195 = vmul.f32 %v186, %v90
  %v196 = vmul.f32 %v187, %v91
  %v197 = vmul.f32 %v185, %v92
  %v198 = vmul.f32 %v186, %v93
  %v199 = vmul.f32 %v187, %v94
  %v200 = vadd.f32 %v173, %v188
  %v201 = vadd.f32 %v174, %v189
  %v202 = vadd.f32 %v175, %v190
  %v203 = vadd.f32 %v176, %v191
  %v204 = vadd.f32 %v177, %v192
  %v205 = vadd.f32 %v178, %v193
  %v206 = vadd.f32 %v179, %v194
  %v207 = vadd.f32 %v180, %v195
  %v208 = vadd.f32 %v181, %v196
  %v209 = vadd.f32 %v182, %v197
  %v210 = vadd.f32 %v183, %v198
  %v211 = vadd.f32 %v184, %v199
  %v212 = vld [vmem:[%s5] sm:$0xff]
  %v213 = vld [vmem:[%s5 + $0x8] sm:$0xff]
  %v214 = vld [vmem:[%s5 + $0x10] sm:$0xff]
  %v215 = vld [vmem:[%s5 + $0x18] sm:$0xff]
  %v216 = vld [vmem:[%s6] sm:$0xff]
  %v217 = vld [vmem:[%s6 + $0x8] sm:$0xff]
  %v218 = vld [vmem:[%s6 + $0x10] sm:$0xff]
  %v219 = vld [vmem:[%s6 + $0x18] sm:$0xff]
  %vm220 = vcmask 261120
  %v222 = vsel %vm220, %v216, 0
  %v225 = vsel %vm220, %v217, 0
  %v228 = vsel %vm220, %v218, 0
  %v231 = vsel %vm220, %v219, 0
  %233 = vmatpush.msra.mxu0 0.0
  %234 = vmatpush.msra.mxu0 0.0
  %235 = vmatpush.msra.mxu0 0.0
  %236 = vmatpush.msra.mxu0 0.0
  %237 = vmatpush.msra.mxu0 0.0
  %238 = vmatpush.msra.mxu0 0.0
  %239 = vmatpush.msra.mxu0 0.0
  %240 = vmatpush.msra.mxu0 0.0
  %241 = vmatpush.msra.mxu0 0.0
  %242 = vmatpush.msra.mxu0 0.0
  %243 = vmatpush.msra.mxu0 0.0
  %244 = vmatpush.msra.mxu0 0.0
  %245 = vmatpush.msra.mxu0 %v209
  %246 = vmatpush.msra.mxu0 %v206
  %247 = vmatpush.msra.mxu0 %v203
  %248 = vmatpush.msra.mxu0 %v200
  %249 = vmatmul.f32.gmra.mxu0 %v222
  %v250 = vpop.f32.mrf.mxu0
  %v251 = vadd.f32 0.0, %v250
  %252 = vmatmul.f32.gmra.mxu0 %v225
  %v253 = vpop.f32.mrf.mxu0
  %v254 = vadd.f32 0.0, %v253
  %255 = vmatmul.f32.gmra.mxu0 %v228
  %v256 = vpop.f32.mrf.mxu0
  %v257 = vadd.f32 0.0, %v256
  %258 = vmatmul.f32.gmra.mxu0 %v231
  %v259 = vpop.f32.mrf.mxu0
  %v260 = vadd.f32 0.0, %v259
  %261 = vdwg.mxu0
  %262 = vmatpush.msra.mxu0 0.0
  %263 = vmatpush.msra.mxu0 0.0
  %264 = vmatpush.msra.mxu0 0.0
  %265 = vmatpush.msra.mxu0 0.0
  %266 = vmatpush.msra.mxu0 0.0
  %267 = vmatpush.msra.mxu0 0.0
  %268 = vmatpush.msra.mxu0 0.0
  %269 = vmatpush.msra.mxu0 0.0
  %270 = vmatpush.msra.mxu0 0.0
  %271 = vmatpush.msra.mxu0 0.0
  %272 = vmatpush.msra.mxu0 0.0
  %273 = vmatpush.msra.mxu0 0.0
  %274 = vmatpush.msra.mxu0 %v210
  %275 = vmatpush.msra.mxu0 %v207
  %276 = vmatpush.msra.mxu0 %v204
  %277 = vmatpush.msra.mxu0 %v201
  %278 = vmatmul.f32.gmra.mxu0 %v222
  %v279 = vpop.f32.mrf.mxu0
  %v280 = vadd.f32 0.0, %v279
  %281 = vmatmul.f32.gmra.mxu0 %v225
  %v282 = vpop.f32.mrf.mxu0
  %v283 = vadd.f32 0.0, %v282
  %284 = vmatmul.f32.gmra.mxu0 %v228
  %v285 = vpop.f32.mrf.mxu0
  %v286 = vadd.f32 0.0, %v285
  %287 = vmatmul.f32.gmra.mxu0 %v231
  %v288 = vpop.f32.mrf.mxu0
  %v289 = vadd.f32 0.0, %v288
  %290 = vdwg.mxu0
  %291 = vmatpush.msra.mxu0 0.0
  %292 = vmatpush.msra.mxu0 0.0
  %293 = vmatpush.msra.mxu0 0.0
  %294 = vmatpush.msra.mxu0 0.0
  %295 = vmatpush.msra.mxu0 0.0
  %296 = vmatpush.msra.mxu0 0.0
  %297 = vmatpush.msra.mxu0 0.0
  %298 = vmatpush.msra.mxu0 0.0
  %299 = vmatpush.msra.mxu0 0.0
  %300 = vmatpush.msra.mxu0 0.0
  %301 = vmatpush.msra.mxu0 0.0
  %302 = vmatpush.msra.mxu0 0.0
  %303 = vmatpush.msra.mxu0 %v211
  %304 = vmatpush.msra.mxu0 %v208
  %305 = vmatpush.msra.mxu0 %v205
  %306 = vmatpush.msra.mxu0 %v202
  %307 = vmatmul.f32.gmra.mxu0 %v222
  %v308 = vpop.f32.mrf.mxu0
  %v309 = vadd.f32 0.0, %v308
  %310 = vmatmul.f32.gmra.mxu0 %v225
  %v311 = vpop.f32.mrf.mxu0
  %v312 = vadd.f32 0.0, %v311
  %313 = vmatmul.f32.gmra.mxu0 %v228
  %v314 = vpop.f32.mrf.mxu0
  %v315 = vadd.f32 0.0, %v314
  %316 = vmatmul.f32.gmra.mxu0 %v231
  %v317 = vpop.f32.mrf.mxu0
  %v318 = vadd.f32 0.0, %v317
  %319 = vdwg.mxu0
  %v321 = vsel %vm220, %v212, 0
  %v324 = vsel %vm220, %v213, 0
  %v327 = vsel %vm220, %v214, 0
  %v330 = vsel %vm220, %v215, 0
  %332 = vmatpush.msra.mxu0 0.0
  %333 = vmatpush.msra.mxu0 0.0
  %334 = vmatpush.msra.mxu0 0.0
  %335 = vmatpush.msra.mxu0 0.0
  %336 = vmatpush.msra.mxu0 0.0
  %337 = vmatpush.msra.mxu0 0.0
  %338 = vmatpush.msra.mxu0 0.0
  %339 = vmatpush.msra.mxu0 0.0
  %340 = vmatpush.msra.mxu0 0.0
  %341 = vmatpush.msra.mxu0 0.0
  %342 = vmatpush.msra.mxu0 0.0
  %343 = vmatpush.msra.mxu0 0.0
  %344 = vmatpush.msra.mxu0 %v131
  %345 = vmatpush.msra.mxu0 %v128
  %346 = vmatpush.msra.mxu0 %v125
  %347 = vmatpush.msra.mxu0 %v122
  %348 = vmatmul.f32.gmra.mxu0 %v321
  %v349 = vpop.f32.mrf.mxu0
  %v350 = vadd.f32 %v251, %v349
  %351 = vmatmul.f32.gmra.mxu0 %v324
  %v352 = vpop.f32.mrf.mxu0
  %v353 = vadd.f32 %v254, %v352
  %354 = vmatmul.f32.gmra.mxu0 %v327
  %v355 = vpop.f32.mrf.mxu0
  %v356 = vadd.f32 %v257, %v355
  %357 = vmatmul.f32.gmra.mxu0 %v330
  %v358 = vpop.f32.mrf.mxu0
  %v359 = vadd.f32 %v260, %v358
  %360 = vdwg.mxu0
  %361 = vmatpush.msra.mxu0 0.0
  %362 = vmatpush.msra.mxu0 0.0
  %363 = vmatpush.msra.mxu0 0.0
  %364 = vmatpush.msra.mxu0 0.0
  %365 = vmatpush.msra.mxu0 0.0
  %366 = vmatpush.msra.mxu0 0.0
  %367 = vmatpush.msra.mxu0 0.0
  %368 = vmatpush.msra.mxu0 0.0
  %369 = vmatpush.msra.mxu0 0.0
  %370 = vmatpush.msra.mxu0 0.0
  %371 = vmatpush.msra.mxu0 0.0
  %372 = vmatpush.msra.mxu0 0.0
  %373 = vmatpush.msra.mxu0 %v132
  %374 = vmatpush.msra.mxu0 %v129
  %375 = vmatpush.msra.mxu0 %v126
  %376 = vmatpush.msra.mxu0 %v123
  %377 = vmatmul.f32.gmra.mxu0 %v321
  %v378 = vpop.f32.mrf.mxu0
  %v379 = vadd.f32 %v280, %v378
  %380 = vmatmul.f32.gmra.mxu0 %v324
  %v381 = vpop.f32.mrf.mxu0
  %v382 = vadd.f32 %v283, %v381
  %383 = vmatmul.f32.gmra.mxu0 %v327
  %v384 = vpop.f32.mrf.mxu0
  %v385 = vadd.f32 %v286, %v384
  %386 = vmatmul.f32.gmra.mxu0 %v330
  %v387 = vpop.f32.mrf.mxu0
  %v388 = vadd.f32 %v289, %v387
  %389 = vdwg.mxu0
  %390 = vmatpush.msra.mxu0 0.0
  %391 = vmatpush.msra.mxu0 0.0
  %392 = vmatpush.msra.mxu0 0.0
  %393 = vmatpush.msra.mxu0 0.0
  %394 = vmatpush.msra.mxu0 0.0
  %395 = vmatpush.msra.mxu0 0.0
  %396 = vmatpush.msra.mxu0 0.0
  %397 = vmatpush.msra.mxu0 0.0
  %398 = vmatpush.msra.mxu0 0.0
  %399 = vmatpush.msra.mxu0 0.0
  %400 = vmatpush.msra.mxu0 0.0
  %401 = vmatpush.msra.mxu0 0.0
  %402 = vmatpush.msra.mxu0 %v133
  %403 = vmatpush.msra.mxu0 %v130
  %404 = vmatpush.msra.mxu0 %v127
  %405 = vmatpush.msra.mxu0 %v124
  %406 = vmatmul.f32.gmra.mxu0 %v321
  %v407 = vpop.f32.mrf.mxu0
  %v408 = vadd.f32 %v309, %v407
  %409 = vmatmul.f32.gmra.mxu0 %v324
  %v410 = vpop.f32.mrf.mxu0
  %v411 = vadd.f32 %v312, %v410
  %412 = vmatmul.f32.gmra.mxu0 %v327
  %v413 = vpop.f32.mrf.mxu0
  %v414 = vadd.f32 %v315, %v413
  %415 = vmatmul.f32.gmra.mxu0 %v330
  %v416 = vpop.f32.mrf.mxu0
  %v417 = vadd.f32 %v318, %v416
  %418 = vdwg.mxu0
  %v419 = vld [vmem:[%s7] sm:$0xff]
  %v420 = vld [vmem:[%s7 + $0x8] sm:$0xff]
  %v421 = vld [vmem:[%s7 + $0x10] sm:$0xff]
  %v422 = vld [vmem:[%s7 + $0x18] sm:$0xff]
  %424 = vset.pattern.permute.xlu0 0
  %425 = vperm.xlu0 %424, %v419
  %v426 = vpop.permute.xlu0 %425
  %429 = vset.pattern.permute.xlu0 0
  %430 = vperm.xlu0 %429, %v420
  %v431 = vpop.permute.xlu0 %430
  %434 = vset.pattern.permute.xlu0 0
  %435 = vperm.xlu0 %434, %v421
  %v436 = vpop.permute.xlu0 %435
  %439 = vset.pattern.permute.xlu0 0
  %440 = vperm.xlu0 %439, %v422
  %v441 = vpop.permute.xlu0 %440
  %v443 = vadd.f32 %v350, %v426
  %v444 = vadd.f32 %v379, %v426
  %v445 = vadd.f32 %v408, %v426
  %v446 = vadd.f32 %v353, %v431
  %v447 = vadd.f32 %v382, %v431
  %v448 = vadd.f32 %v411, %v431
  %v449 = vadd.f32 %v356, %v436
  %v450 = vadd.f32 %v385, %v436
  %v451 = vadd.f32 %v414, %v436
  %v452 = vadd.f32 %v359, %v441
  %v453 = vadd.f32 %v388, %v441
  %v454 = vadd.f32 %v417, %v441
  %v455 = vmax.f32 %v443, 0.0
  %v456 = vmax.f32 %v444, 0.0
  %v457 = vmax.f32 %v445, 0.0
  %v458 = vmax.f32 %v446, 0.0
  %v459 = vmax.f32 %v447, 0.0
  %v460 = vmax.f32 %v448, 0.0
  %v461 = vmax.f32 %v449, 0.0
  %v462 = vmax.f32 %v450, 0.0
  %v463 = vmax.f32 %v451, 0.0
  %v464 = vmax.f32 %v452, 0.0
  %v465 = vmax.f32 %v453, 0.0
  %v466 = vmax.f32 %v454, 0.0
  %v467 = vld [vmem:[%s8] sm:$0xff]
  %v468 = vld [vmem:[%s8 + $0x8] sm:$0xff]
  %v469 = vld [vmem:[%s8 + $0x10] sm:$0xff]
  %v470 = vld [vmem:[%s8 + $0x18] sm:$0xff]
  %v471 = vld [vmem:[%s9] sm:$0xff]
  %v472 = vld [vmem:[%s9 + $0x8] sm:$0xff]
  %v473 = vld [vmem:[%s9 + $0x10] sm:$0xff]
  %v474 = vld [vmem:[%s9 + $0x18] sm:$0xff]
  %v475 = vmul.f32 %v455, %v77
  %v476 = vmul.f32 %v456, %v78
  %v477 = vmul.f32 %v457, %v79
  %v478 = vmul.f32 %v458, %v77
  %v479 = vmul.f32 %v459, %v78
  %v480 = vmul.f32 %v460, %v79
  %v481 = vmul.f32 %v461, %v77
  %v482 = vmul.f32 %v462, %v78
  %v483 = vmul.f32 %v463, %v79
  %v484 = vmul.f32 %v464, %v77
  %v485 = vmul.f32 %v465, %v78
  %v486 = vmul.f32 %v466, %v79
  %v487 = vadd.f32 %v475, %v476
  %v488 = vadd.f32 %v487, %v477
  %489 = vadd.xlane.f32.xlu0 %v488
  %v490 = vpop.xlane.xlu0 %489
  %v491 = vadd.f32 %v478, %v479
  %v492 = vadd.f32 %v491, %v480
  %493 = vadd.xlane.f32.xlu0 %v492
  %v494 = vpop.xlane.xlu0 %493
  %v495 = vadd.f32 %v481, %v482
  %v496 = vadd.f32 %v495, %v483
  %497 = vadd.xlane.f32.xlu0 %v496
  %v498 = vpop.xlane.xlu0 %497
  %v499 = vadd.f32 %v484, %v485
  %v500 = vadd.f32 %v499, %v486
  %501 = vadd.xlane.f32.xlu0 %v500
  %v502 = vpop.xlane.xlu0 %501
  %v503 = vmul.f32 %v490, 0.0033333334
  %v504 = vmul.f32 %v494, 0.0033333334
  %v505 = vmul.f32 %v498, 0.0033333334
  %v506 = vmul.f32 %v502, 0.0033333334
  %v507 = vsub.f32 %v455, %v503
  %v508 = vsub.f32 %v456, %v503
  %v509 = vsub.f32 %v457, %v503
  %v510 = vsub.f32 %v458, %v504
  %v511 = vsub.f32 %v459, %v504
  %v512 = vsub.f32 %v460, %v504
  %v513 = vsub.f32 %v461, %v505
  %v514 = vsub.f32 %v462, %v505
  %v515 = vsub.f32 %v463, %v505
  %v516 = vsub.f32 %v464, %v506
  %v517 = vsub.f32 %v465, %v506
  %v518 = vsub.f32 %v466, %v506
  %v519 = vmul.f32 %v507, %v77
  %v520 = vmul.f32 %v508, %v78
  %v521 = vmul.f32 %v509, %v79
  %v522 = vmul.f32 %v510, %v77
  %v523 = vmul.f32 %v511, %v78
  %v524 = vmul.f32 %v512, %v79
  %v525 = vmul.f32 %v513, %v77
  %v526 = vmul.f32 %v514, %v78
  %v527 = vmul.f32 %v515, %v79
  %v528 = vmul.f32 %v516, %v77
  %v529 = vmul.f32 %v517, %v78
  %v530 = vmul.f32 %v518, %v79
  %v531 = vmul.f32 %v519, %v519
  %v532 = vmul.f32 %v520, %v520
  %v533 = vmul.f32 %v521, %v521
  %v534 = vmul.f32 %v522, %v522
  %v535 = vmul.f32 %v523, %v523
  %v536 = vmul.f32 %v524, %v524
  %v537 = vmul.f32 %v525, %v525
  %v538 = vmul.f32 %v526, %v526
  %v539 = vmul.f32 %v527, %v527
  %v540 = vmul.f32 %v528, %v528
  %v541 = vmul.f32 %v529, %v529
  %v542 = vmul.f32 %v530, %v530
  %v543 = vadd.f32 %v531, %v532
  %v544 = vadd.f32 %v543, %v533
  %545 = vadd.xlane.f32.xlu0 %v544
  %v546 = vpop.xlane.xlu0 %545
  %v547 = vadd.f32 %v534, %v535
  %v548 = vadd.f32 %v547, %v536
  %549 = vadd.xlane.f32.xlu0 %v548
  %v550 = vpop.xlane.xlu0 %549
  %v551 = vadd.f32 %v537, %v538
  %v552 = vadd.f32 %v551, %v539
  %553 = vadd.xlane.f32.xlu0 %v552
  %v554 = vpop.xlane.xlu0 %553
  %v555 = vadd.f32 %v540, %v541
  %v556 = vadd.f32 %v555, %v542
  %557 = vadd.xlane.f32.xlu0 %v556
  %v558 = vpop.xlane.xlu0 %557
  %v559 = vmul.f32 %v546, 0.0033333334
  %v560 = vmul.f32 %v550, 0.0033333334
  %v561 = vmul.f32 %v554, 0.0033333334
  %v562 = vmul.f32 %v558, 0.0033333334
  %v563 = vadd.f32 %v559, 1e-05
  %v564 = vadd.f32 %v560, 1e-05
  %v565 = vadd.f32 %v561, 1e-05
  %v566 = vadd.f32 %v562, 1e-05
  %v567 = vrsqrt.pop %v563
  %v568 = vmul.f32 %v567, %v563
  %v569 = vmul.f32 %v568, %v567
  %v570 = vmul.f32 0.5, %v569
  %v571 = vsub.f32 1.5, %v570
  %v572 = vmul.f32 %v567, %v571
  %vm573 = vweird.f32 %v563
  %vm574 = vweird.f32 %v567
  %vm575 = vmor %vm573, %vm574
  %v576 = vsel %vm575, %v567, %v572
  %v577 = vrsqrt.pop %v564
  %v578 = vmul.f32 %v577, %v564
  %v579 = vmul.f32 %v578, %v577
  %v580 = vmul.f32 0.5, %v579
  %v581 = vsub.f32 1.5, %v580
  %v582 = vmul.f32 %v577, %v581
  %vm583 = vweird.f32 %v564
  %vm584 = vweird.f32 %v577
  %vm585 = vmor %vm583, %vm584
  %v586 = vsel %vm585, %v577, %v582
  %v587 = vrsqrt.pop %v565
  %v588 = vmul.f32 %v587, %v565
  %v589 = vmul.f32 %v588, %v587
  %v590 = vmul.f32 0.5, %v589
  %v591 = vsub.f32 1.5, %v590
  %v592 = vmul.f32 %v587, %v591
  %vm593 = vweird.f32 %v565
  %vm594 = vweird.f32 %v587
  %vm595 = vmor %vm593, %vm594
  %v596 = vsel %vm595, %v587, %v592
  %v597 = vrsqrt.pop %v566
  %v598 = vmul.f32 %v597, %v566
  %v599 = vmul.f32 %v598, %v597
  %v600 = vmul.f32 0.5, %v599
  %v601 = vsub.f32 1.5, %v600
  %v602 = vmul.f32 %v597, %v601
  %vm603 = vweird.f32 %v566
  %vm604 = vweird.f32 %v597
  %vm605 = vmor %vm603, %vm604
  %v606 = vsel %vm605, %v597, %v602
  %v607 = vmul.f32 %v507, %v576
  %v608 = vmul.f32 %v508, %v576
  %v609 = vmul.f32 %v509, %v576
  %v610 = vmul.f32 %v510, %v586
  %v611 = vmul.f32 %v511, %v586
  %v612 = vmul.f32 %v512, %v586
  %v613 = vmul.f32 %v513, %v596
  %v614 = vmul.f32 %v514, %v596
  %v615 = vmul.f32 %v515, %v596
  %v616 = vmul.f32 %v516, %v606
  %v617 = vmul.f32 %v517, %v606
  %v618 = vmul.f32 %v518, %v606
  %620 = vset.pattern.permute.xlu0 0
  %621 = vperm.xlu0 %620, %v467
  %v622 = vpop.permute.xlu0 %621
  %625 = vset.pattern.permute.xlu0 0
  %626 = vperm.xlu0 %625, %v468
  %v627 = vpop.permute.xlu0 %626
  %630 = vset.pattern.permute.xlu0 0
  %631 = vperm.xlu0 %630, %v469
  %v632 = vpop.permute.xlu0 %631
  %635 = vset.pattern.permute.xlu0 0
  %636 = vperm.xlu0 %635, %v470
  %v637 = vpop.permute.xlu0 %636
  %v639 = vmul.f32 %v607, %v622
  %v640 = vmul.f32 %v608, %v622
  %v641 = vmul.f32 %v609, %v622
  %v642 = vmul.f32 %v610, %v627
  %v643 = vmul.f32 %v611, %v627
  %v644 = vmul.f32 %v612, %v627
  %v645 = vmul.f32 %v613, %v632
  %v646 = vmul.f32 %v614, %v632
  %v647 = vmul.f32 %v615, %v632
  %v648 = vmul.f32 %v616, %v637
  %v649 = vmul.f32 %v617, %v637
  %v650 = vmul.f32 %v618, %v637
  %652 = vset.pattern.permute.xlu0 0
  %653 = vperm.xlu0 %652, %v471
  %v654 = vpop.permute.xlu0 %653
  %657 = vset.pattern.permute.xlu0 0
  %658 = vperm.xlu0 %657, %v472
  %v659 = vpop.permute.xlu0 %658
  %662 = vset.pattern.permute.xlu0 0
  %663 = vperm.xlu0 %662, %v473
  %v664 = vpop.permute.xlu0 %663
  %667 = vset.pattern.permute.xlu0 0
  %668 = vperm.xlu0 %667, %v474
  %v669 = vpop.permute.xlu0 %668
  %v671 = vadd.f32 %v639, %v654
  %v672 = vadd.f32 %v640, %v654
  %v673 = vadd.f32 %v641, %v654
  %v674 = vadd.f32 %v642, %v659
  %v675 = vadd.f32 %v643, %v659
  %v676 = vadd.f32 %v644, %v659
  %v677 = vadd.f32 %v645, %v664
  %v678 = vadd.f32 %v646, %v664
  %v679 = vadd.f32 %v647, %v664
  %v680 = vadd.f32 %v648, %v669
  %v681 = vadd.f32 %v649, %v669
  %v682 = vadd.f32 %v650, %v669
  %v683 = vld [vmem:[%s10] sm:$0xff]
  %v684 = vld [vmem:[%s10 + $0x8] sm:$0xff]
  %v685 = vld [vmem:[%s11] sm:$0xff]
  %v686 = vld [vmem:[%s11 + $0x8] sm:$0xff]
  %688 = vset.pattern.permute.xlu0 0
  %689 = vperm.xlu0 %688, %v685
  %v690 = vpop.permute.xlu0 %689
  %693 = vset.pattern.permute.xlu0 0
  %694 = vperm.xlu0 %693, %v686
  %v695 = vpop.permute.xlu0 %694
  %v698 = vsel %vm220, %v683, 0
  %v701 = vsel %vm220, %v684, 0
  %703 = vmatpush.msra.mxu0 0.0
  %704 = vmatpush.msra.mxu0 0.0
  %705 = vmatpush.msra.mxu0 0.0
  %706 = vmatpush.msra.mxu0 0.0
  %707 = vmatpush.msra.mxu0 0.0
  %708 = vmatpush.msra.mxu0 0.0
  %709 = vmatpush.msra.mxu0 0.0
  %710 = vmatpush.msra.mxu0 0.0
  %711 = vmatpush.msra.mxu0 0.0
  %712 = vmatpush.msra.mxu0 0.0
  %713 = vmatpush.msra.mxu0 0.0
  %714 = vmatpush.msra.mxu0 0.0
  %715 = vmatpush.msra.mxu0 %v680
  %716 = vmatpush.msra.mxu0 %v677
  %717 = vmatpush.msra.mxu0 %v674
  %718 = vmatpush.msra.mxu0 %v671
  %719 = vmatmul.f32.gmra.mxu0 %v698
  %v720 = vpop.f32.mrf.mxu0
  %v721 = vadd.f32 %v690, %v720
  %722 = vmatmul.f32.gmra.mxu0 %v701
  %v723 = vpop.f32.mrf.mxu0
  %v724 = vadd.f32 %v695, %v723
  %725 = vdwg.mxu0
  %726 = vmatpush.msra.mxu0 0.0
  %727 = vmatpush.msra.mxu0 0.0
  %728 = vmatpush.msra.mxu0 0.0
  %729 = vmatpush.msra.mxu0 0.0
  %730 = vmatpush.msra.mxu0 0.0
  %731 = vmatpush.msra.mxu0 0.0
  %732 = vmatpush.msra.mxu0 0.0
  %733 = vmatpush.msra.mxu0 0.0
  %734 = vmatpush.msra.mxu0 0.0
  %735 = vmatpush.msra.mxu0 0.0
  %736 = vmatpush.msra.mxu0 0.0
  %737 = vmatpush.msra.mxu0 0.0
  %738 = vmatpush.msra.mxu0 %v681
  %739 = vmatpush.msra.mxu0 %v678
  %740 = vmatpush.msra.mxu0 %v675
  %741 = vmatpush.msra.mxu0 %v672
  %742 = vmatmul.f32.gmra.mxu0 %v698
  %v743 = vpop.f32.mrf.mxu0
  %v744 = vadd.f32 %v690, %v743
  %745 = vmatmul.f32.gmra.mxu0 %v701
  %v746 = vpop.f32.mrf.mxu0
  %v747 = vadd.f32 %v695, %v746
  %748 = vdwg.mxu0
  %749 = vmatpush.msra.mxu0 0.0
  %750 = vmatpush.msra.mxu0 0.0
  %751 = vmatpush.msra.mxu0 0.0
  %752 = vmatpush.msra.mxu0 0.0
  %753 = vmatpush.msra.mxu0 0.0
  %754 = vmatpush.msra.mxu0 0.0
  %755 = vmatpush.msra.mxu0 0.0
  %756 = vmatpush.msra.mxu0 0.0
  %757 = vmatpush.msra.mxu0 0.0
  %758 = vmatpush.msra.mxu0 0.0
  %759 = vmatpush.msra.mxu0 0.0
  %760 = vmatpush.msra.mxu0 0.0
  %761 = vmatpush.msra.mxu0 %v682
  %762 = vmatpush.msra.mxu0 %v679
  %763 = vmatpush.msra.mxu0 %v676
  %764 = vmatpush.msra.mxu0 %v673
  %765 = vmatmul.f32.gmra.mxu0 %v698
  %v766 = vpop.f32.mrf.mxu0
  %v767 = vadd.f32 %v690, %v766
  %768 = vmatmul.f32.gmra.mxu0 %v701
  %v769 = vpop.f32.mrf.mxu0
  %v770 = vadd.f32 %v695, %v769
  %771 = vdwg.mxu0
  %v772 = vmax.f32 %v721, 0.0
  %v773 = vmax.f32 %v744, 0.0
  %v774 = vmax.f32 %v767, 0.0
  %v775 = vmax.f32 %v724, 0.0
  %v776 = vmax.f32 %v747, 0.0
  %v777 = vmax.f32 %v770, 0.0
  %v778 = vld [vmem:[%s12] sm:$0xff]
  %v779 = vld [vmem:[%s12 + $0x8] sm:$0xff]
  %v780 = vld [vmem:[%s13] sm:$0xff]
  %v781 = vld [vmem:[%s13 + $0x8] sm:$0xff]
  %v782 = vmul.f32 %v772, %v77
  %v783 = vmul.f32 %v773, %v78
  %v784 = vmul.f32 %v774, %v79
  %v785 = vmul.f32 %v775, %v77
  %v786 = vmul.f32 %v776, %v78
  %v787 = vmul.f32 %v777, %v79
  %v788 = vadd.f32 %v782, %v783
  %v789 = vadd.f32 %v788, %v784
  %790 = vadd.xlane.f32.xlu0 %v789
  %v791 = vpop.xlane.xlu0 %790
  %v792 = vadd.f32 %v785, %v786
  %v793 = vadd.f32 %v792, %v787
  %794 = vadd.xlane.f32.xlu0 %v793
  %v795 = vpop.xlane.xlu0 %794
  %v796 = vmul.f32 %v791, 0.0033333334
  %v797 = vmul.f32 %v795, 0.0033333334
  %v798 = vsub.f32 %v772, %v796
  %v799 = vsub.f32 %v773, %v796
  %v800 = vsub.f32 %v774, %v796
  %v801 = vsub.f32 %v775, %v797
  %v802 = vsub.f32 %v776, %v797
  %v803 = vsub.f32 %v777, %v797
  %v804 = vmul.f32 %v798, %v77
  %v805 = vmul.f32 %v799, %v78
  %v806 = vmul.f32 %v800, %v79
  %v807 = vmul.f32 %v801, %v77
  %v808 = vmul.f32 %v802, %v78
  %v809 = vmul.f32 %v803, %v79
  %v810 = vmul.f32 %v804, %v804
  %v811 = vmul.f32 %v805, %v805
  %v812 = vmul.f32 %v806, %v806
  %v813 = vmul.f32 %v807, %v807
  %v814 = vmul.f32 %v808, %v808
  %v815 = vmul.f32 %v809, %v809
  %v816 = vadd.f32 %v810, %v811
  %v817 = vadd.f32 %v816, %v812
  %818 = vadd.xlane.f32.xlu0 %v817
  %v819 = vpop.xlane.xlu0 %818
  %v820 = vadd.f32 %v813, %v814
  %v821 = vadd.f32 %v820, %v815
  %822 = vadd.xlane.f32.xlu0 %v821
  %v823 = vpop.xlane.xlu0 %822
  %v824 = vmul.f32 %v819, 0.0033333334
  %v825 = vmul.f32 %v823, 0.0033333334
  %v826 = vadd.f32 %v824, 1e-05
  %v827 = vadd.f32 %v825, 1e-05
  %v828 = vrsqrt.pop %v826
  %v829 = vmul.f32 %v828, %v826
  %v830 = vmul.f32 %v829, %v828
  %v831 = vmul.f32 0.5, %v830
  %v832 = vsub.f32 1.5, %v831
  %v833 = vmul.f32 %v828, %v832
  %vm834 = vweird.f32 %v826
  %vm835 = vweird.f32 %v828
  %vm836 = vmor %vm834, %vm835
  %v837 = vsel %vm836, %v828, %v833
  %v838 = vrsqrt.pop %v827
  %v839 = vmul.f32 %v838, %v827
  %v840 = vmul.f32 %v839, %v838
  %v841 = vmul.f32 0.5, %v840
  %v842 = vsub.f32 1.5, %v841
  %v843 = vmul.f32 %v838, %v842
  %vm844 = vweird.f32 %v827
  %vm845 = vweird.f32 %v838
  %vm846 = vmor %vm844, %vm845
  %v847 = vsel %vm846, %v838, %v843
  %v848 = vmul.f32 %v798, %v837
  %v849 = vmul.f32 %v799, %v837
  %v850 = vmul.f32 %v800, %v837
  %v851 = vmul.f32 %v801, %v847
  %v852 = vmul.f32 %v802, %v847
  %v853 = vmul.f32 %v803, %v847
  %855 = vset.pattern.permute.xlu0 0
  %856 = vperm.xlu0 %855, %v778
  %v857 = vpop.permute.xlu0 %856
  %860 = vset.pattern.permute.xlu0 0
  %861 = vperm.xlu0 %860, %v779
  %v862 = vpop.permute.xlu0 %861
  %v864 = vmul.f32 %v848, %v857
  %v865 = vmul.f32 %v849, %v857
  %v866 = vmul.f32 %v850, %v857
  %v867 = vmul.f32 %v851, %v862
  %v868 = vmul.f32 %v852, %v862
  %v869 = vmul.f32 %v853, %v862
  %871 = vset.pattern.permute.xlu0 0
  %872 = vperm.xlu0 %871, %v780
  %v873 = vpop.permute.xlu0 %872
  %876 = vset.pattern.permute.xlu0 0
  %877 = vperm.xlu0 %876, %v781
  %v878 = vpop.permute.xlu0 %877
  %v880 = vadd.f32 %v864, %v873
  %v881 = vadd.f32 %v865, %v873
  %v882 = vadd.f32 %v866, %v873
  %v883 = vadd.f32 %v867, %v878
  %v884 = vadd.f32 %v868, %v878
  %v885 = vadd.f32 %v869, %v878
  %v886 = vld [vmem:[%s14] sm:$0xff]
  %v887 = vld [vmem:[%s15] sm:$0xff]
  %889 = vset.pattern.permute.xlu0 0
  %890 = vperm.xlu0 %889, %v887
  %v891 = vpop.permute.xlu0 %890
  %vm893 = vcmask 130048
  %v895 = vsel %vm893, %v886, 0
  %897 = vmatpush.msra.mxu0 0.0
  %898 = vmatpush.msra.mxu0 0.0
  %899 = vmatpush.msra.mxu0 0.0
  %900 = vmatpush.msra.mxu0 0.0
  %901 = vmatpush.msra.mxu0 0.0
  %902 = vmatpush.msra.mxu0 0.0
  %903 = vmatpush.msra.mxu0 0.0
  %904 = vmatpush.msra.mxu0 0.0
  %905 = vmatpush.msra.mxu0 0.0
  %906 = vmatpush.msra.mxu0 0.0
  %907 = vmatpush.msra.mxu0 0.0
  %908 = vmatpush.msra.mxu0 0.0
  %909 = vmatpush.msra.mxu0 0.0
  %910 = vmatpush.msra.mxu0 0.0
  %911 = vmatpush.msra.mxu0 %v883
  %912 = vmatpush.msra.mxu0 %v880
  %913 = vmatmul.f32.gmra.mxu0 %v895
  %v914 = vpop.f32.mrf.mxu0
  %v915 = vadd.f32 %v891, %v914
  %916 = vdwg.mxu0
  %917 = vmatpush.msra.mxu0 0.0
  %918 = vmatpush.msra.mxu0 0.0
  %919 = vmatpush.msra.mxu0 0.0
  %920 = vmatpush.msra.mxu0 0.0
  %921 = vmatpush.msra.mxu0 0.0
  %922 = vmatpush.msra.mxu0 0.0
  %923 = vmatpush.msra.mxu0 0.0
  %924 = vmatpush.msra.mxu0 0.0
  %925 = vmatpush.msra.mxu0 0.0
  %926 = vmatpush.msra.mxu0 0.0
  %927 = vmatpush.msra.mxu0 0.0
  %928 = vmatpush.msra.mxu0 0.0
  %929 = vmatpush.msra.mxu0 0.0
  %930 = vmatpush.msra.mxu0 0.0
  %931 = vmatpush.msra.mxu0 %v884
  %932 = vmatpush.msra.mxu0 %v881
  %933 = vmatmul.f32.gmra.mxu0 %v895
  %v934 = vpop.f32.mrf.mxu0
  %v935 = vadd.f32 %v891, %v934
  %936 = vdwg.mxu0
  %937 = vmatpush.msra.mxu0 0.0
  %938 = vmatpush.msra.mxu0 0.0
  %939 = vmatpush.msra.mxu0 0.0
  %940 = vmatpush.msra.mxu0 0.0
  %941 = vmatpush.msra.mxu0 0.0
  %942 = vmatpush.msra.mxu0 0.0
  %943 = vmatpush.msra.mxu0 0.0
  %944 = vmatpush.msra.mxu0 0.0
  %945 = vmatpush.msra.mxu0 0.0
  %946 = vmatpush.msra.mxu0 0.0
  %947 = vmatpush.msra.mxu0 0.0
  %948 = vmatpush.msra.mxu0 0.0
  %949 = vmatpush.msra.mxu0 0.0
  %950 = vmatpush.msra.mxu0 0.0
  %951 = vmatpush.msra.mxu0 %v885
  %952 = vmatpush.msra.mxu0 %v882
  %953 = vmatmul.f32.gmra.mxu0 %v895
  %v954 = vpop.f32.mrf.mxu0
  %v955 = vadd.f32 %v891, %v954
  %956 = vdwg.mxu0
  %v957 = vmax.f32 %v915, 0.0
  %v958 = vmax.f32 %v935, 0.0
  %v959 = vmax.f32 %v955, 0.0
  %v960 = vld [vmem:[%s16] sm:$0xff]
  %v961 = vld [vmem:[%s17] sm:$0xff]
  %v962 = vmul.f32 %v957, %v77
  %v963 = vmul.f32 %v958, %v78
  %v964 = vmul.f32 %v959, %v79
  %v965 = vadd.f32 %v962, %v963
  %v966 = vadd.f32 %v965, %v964
  %967 = vadd.xlane.f32.xlu0 %v966
  %v968 = vpop.xlane.xlu0 %967
  %v969 = vmul.f32 %v968, 0.0033333334
  %v970 = vsub.f32 %v957, %v969
  %v971 = vsub.f32 %v958, %v969
  %v972 = vsub.f32 %v959, %v969
  %v973 = vmul.f32 %v970, %v77
  %v974 = vmul.f32 %v971, %v78
  %v975 = vmul.f32 %v972, %v79
  %v976 = vmul.f32 %v973, %v973
  %v977 = vmul.f32 %v974, %v974
  %v978 = vmul.f32 %v975, %v975
  %v979 = vadd.f32 %v976, %v977
  %v980 = vadd.f32 %v979, %v978
  %981 = vadd.xlane.f32.xlu0 %v980
  %v982 = vpop.xlane.xlu0 %981
  %v983 = vmul.f32 %v982, 0.0033333334
  %v984 = vadd.f32 %v983, 1e-05
  %v985 = vrsqrt.pop %v984
  %v986 = vmul.f32 %v985, %v984
  %v987 = vmul.f32 %v986, %v985
  %v988 = vmul.f32 0.5, %v987
  %v989 = vsub.f32 1.5, %v988
  %v990 = vmul.f32 %v985, %v989
  %vm991 = vweird.f32 %v984
  %vm992 = vweird.f32 %v985
  %vm993 = vmor %vm991, %vm992
  %v994 = vsel %vm993, %v985, %v990
  %v995 = vmul.f32 %v970, %v994
  %v996 = vmul.f32 %v971, %v994
  %v997 = vmul.f32 %v972, %v994
  %999 = vset.pattern.permute.xlu0 0
  %1000 = vperm.xlu0 %999, %v960
  %v1001 = vpop.permute.xlu0 %1000
  %v1003 = vmul.f32 %v995, %v1001
  %v1004 = vmul.f32 %v996, %v1001
  %v1005 = vmul.f32 %v997, %v1001
  %1007 = vset.pattern.permute.xlu0 0
  %1008 = vperm.xlu0 %1007, %v961
  %v1009 = vpop.permute.xlu0 %1008
  %v1011 = vadd.f32 %v1003, %v1009
  %v1012 = vadd.f32 %v1004, %v1009
  %v1013 = vadd.f32 %v1005, %v1009
  %v1014 = vld [vmem:[%s18] sm:$0xff]
  %1016 = vset.pattern.permute.xlu0 0
  %1017 = vperm.xlu0 %1016, %v1014
  %v1018 = vpop.permute.xlu0 %1017
  %v1020 = vmul.f32 %v1011, %v1018
  %v1021 = vmul.f32 %v1012, %v1018
  %v1022 = vmul.f32 %v1013, %v1018
  %v1023 = vrot.slane %v1020, 4
  %v1024 = vadd.f32 %v1020, %v1023
  %v1025 = vrot.slane %v1024, 2
  %v1026 = vadd.f32 %v1024, %v1025
  %v1027 = vrot.slane %v1026, 1
  %v1028 = vadd.f32 %v1026, %v1027
  %v1029 = vrot.slane %v1021, 4
  %v1030 = vadd.f32 %v1021, %v1029
  %v1031 = vrot.slane %v1030, 2
  %v1032 = vadd.f32 %v1030, %v1031
  %v1033 = vrot.slane %v1032, 1
  %v1034 = vadd.f32 %v1032, %v1033
  %v1035 = vrot.slane %v1022, 4
  %v1036 = vadd.f32 %v1022, %v1035
  %v1037 = vrot.slane %v1036, 2
  %v1038 = vadd.f32 %v1036, %v1037
  %v1039 = vrot.slane %v1038, 1
  %v1040 = vadd.f32 %v1038, %v1039
  %v1041 = vld [vmem:[#allocation2] sm:$0x1]
  %1043 = vset.pattern.permute.xlu0 0
  %1044 = vperm.xlu0 %1043, %v1041
  %v1045 = vpop.permute.xlu0 %1044
  %v1047 = vperm.slane %v1045, 0
  %v1048 = vadd.f32 %v1028, %v1047
  %v1049 = vadd.f32 %v1034, %v1047
  %v1050 = vadd.f32 %v1040, %v1047
  %v1051 = vxor.u32 %v1048, 2147483648
  %v1052 = vxor.u32 %v1049, 2147483648
  %v1053 = vxor.u32 %v1050, 2147483648
  %v1054 = vmul.f32 %v1051, 1.442695
  %v1055 = vpow.pop %v1054
  %v1056 = vmul.f32 %v1052, 1.442695
  %v1057 = vpow.pop %v1056
  %v1058 = vmul.f32 %v1053, 1.442695
  %v1059 = vpow.pop %v1058
  %v1060 = vadd.f32 %v1055, 1.0
  %v1061 = vadd.f32 %v1057, 1.0
  %v1062 = vadd.f32 %v1059, 1.0
  %v1063 = vrcp.pop %v1060
  %v1064 = vmul.f32 %v1060, %v1063
  %v1065 = vsub.f32 1.0, %v1064
  %v1066 = vmul.f32 %v1063, %v1065
  %v1067 = vadd.f32 %v1063, %v1066
  %vm1068 = vweird.f32 %v1060
  %vm1069 = vweird.f32 %v1063
  %vm1070 = vmor %vm1068, %vm1069
  %v1071 = vsel %vm1070, %v1063, %v1067
  %v1072 = vand.u32 2147483647, %v1060
  %vm1073 = vcmp.eq.f32.partialorder %v1072, 8.507059e+37
  %v1074 = vand.u32 %v1060, 2147483648
  %v1075 = vor.u32 1.1754944e-38, %v1074
  %v1076 = vsel %vm1073, %v1075, %v1071
  %v1077 = vmul.f32 1.0, %v1076
  %v1078 = vrcp.pop %v1061
  %v1079 = vmul.f32 %v1061, %v1078
  %v1080 = vsub.f32 1.0, %v1079
  %v1081 = vmul.f32 %v1078, %v1080
  %v1082 = vadd.f32 %v1078, %v1081
  %vm1083 = vweird.f32 %v1061
  %vm1084 = vweird.f32 %v1078
  %vm1085 = vmor %vm1083, %vm1084
  %v1086 = vsel %vm1085, %v1078, %v1082
  %v1087 = vand.u32 2147483647, %v1061
  %vm1088 = vcmp.eq.f32.partialorder %v1087, 8.507059e+37
  %v1089 = vand.u32 %v1061, 2147483648
  %v1090 = vor.u32 1.1754944e-38, %v1089
  %v1091 = vsel %vm1088, %v1090, %v1086
  %v1092 = vmul.f32 1.0, %v1091
  %v1093 = vrcp.pop %v1062
  %v1094 = vmul.f32 %v1062, %v1093
  %v1095 = vsub.f32 1.0, %v1094
  %v1096 = vmul.f32 %v1093, %v1095
  %v1097 = vadd.f32 %v1093, %v1096
  %vm1098 = vweird.f32 %v1062
  %vm1099 = vweird.f32 %v1093
  %vm1100 = vmor %vm1098, %vm1099
  %v1101 = vsel %vm1100, %v1093, %v1097
  %v1102 = vand.u32 2147483647, %v1062
  %vm1103 = vcmp.eq.f32.partialorder %v1102, 8.507059e+37
  %v1104 = vand.u32 %v1062, 2147483648
  %v1105 = vor.u32 1.1754944e-38, %v1104
  %v1106 = vsel %vm1103, %v1105, %v1101
  %v1107 = vmul.f32 1.0, %v1106
  %v1111 = vrot.slane %v1092, 7
  %v1112 = vrot.slane %v1107, 6
  %vm1113 = vcmask 1040384
  %v1114 = vsel %vm1113, %v1077, %v1111
  %vm1115 = vcmask 1041408
  %v1116 = vsel %vm1115, %v1114, %v1112
  %v1118 = vlaneseq
  %vm1119 = vcmp.ge.s32.totalorder %v1118, 0
  %vm1120 = vcmp.lt.s32.totalorder %v1118, 384
  %vm1121 = vmand %vm1119, %vm1120
  %1122 = vst.msk [vmem:[%s20] sm:$0x7] %vm1121, %v1116
  // Predicated region
  $region82: #{cdr_sb_forward.1} parent=0 // pred_check
    _
  $region83: #{cdr_sb_forward.1} parent=0 // pred_check_branch
    %1124 = sbr.rel (0) target = $region85
  $region84: #{cdr_sb_forward.1} parent=0 // pred_region
    _
  $region85: #{cdr_sb_forward.1} parent=0 // pred_fallthru
    _
  // Predicated region
  $region86: #{cdr_sb_forward.1} parent=0 // pred_check
    _
  $region87: #{cdr_sb_forward.1} parent=0 // pred_check_branch
    %1126 = sbr.rel (0) target = $region89
  $region88: #{cdr_sb_forward.1} parent=0 // pred_region
    _
  $region89: #{cdr_sb_forward.1} parent=0 // pred_fallthru
    _

</llo_original>
